<compile_context>
chip_gen: v7x
topology: tpu7x:2x2x1
jax: 0.10.0
libtpu: 0.0.40
codegen_flags: <defaults>
</compile_context>

<pallas_src>
import jax
import jax.numpy as jnp
from jax import lax
from jax.experimental import pallas as pl
from jax.experimental.pallas import tpu as pltpu
from jax.scipy.linalg import block_diag

# Problem configuration: obs_grid_shape "8x8" < 12  ->  conv1 k=2,s=3 ; conv2 k=2,s=1
B       = 2
CIN_OBS = 4
CIN_ACT = 2
CIN     = CIN_OBS + CIN_ACT            # 6 channels after concat
GRID    = 8
K1, S1  = 2, 3
K2, S2  = 2, 1
OH1     = (GRID - K1) // S1 + 1        # 3
OH2     = (OH1 - K2) // S2 + 1         # 2
C1      = 32
C2      = 32
HID     = 32                           # args.rnn_hidden_dim
FLAT    = C2 * OH2 * OH2               # 128
NPOS2   = OH2 * OH2                    # 4  conv2 output positions
NK2     = K2 * K2                      # 4  conv1 outputs feeding each conv2 position
NDUP    = NPOS2 * NK2                  # 16 duplicated conv1 patches per batch row
P1      = K1 * K1 * CIN                # 24 elements per conv1 im2col patch


def _elu(v):
    # exp argument clamped to <= 0 so the dead branch never overflows.
    return jnp.where(v > 0, v, jnp.exp(jnp.minimum(v, 0.0)) - 1.0)


def agent_kernel(patch_ref, h_ref,
                 w1_ref, b1_ref, w2_ref, b2_ref,
                 wfc1_ref, bfc1_ref,
                 wgru_ref, bgru_ref,
                 wfc2_ref, bfc2_ref,
                 out_ref):
    h_in = h_ref[...]                                           # (B, HID)  f32

    # ---- conv1 + ELU: ONE bf16 MXU dot over all duplicated im2col patches ----
    y1 = jnp.dot(patch_ref[...], w1_ref[...],
                 preferred_element_type=jnp.float32) + b1_ref[...]   # (B, NDUP*C1)
    y1 = _elu(y1)

    # ---- conv2 + ELU: block-diagonal weight -> lanes come out already in the
    #      (pos-major, channel-minor) flatten order that matches the permuted fc1 ----
    flat = jnp.dot(y1.astype(jnp.bfloat16), w2_ref[...],
                   preferred_element_type=jnp.float32) + b2_ref[...]  # (B, FLAT)
    flat = _elu(flat)

    # ---- fc1 + ReLU ----
    xfc = jnp.maximum(
        jnp.dot(flat.astype(jnp.bfloat16), wfc1_ref[...],
                preferred_element_type=jnp.float32) + bfc1_ref[...], 0.0)  # (B, HID)

    # ---- GRUCell, fused into a single dot: [xfc | h] @ blockdiag(Wih^T, Whh^T) ----
    xh = jnp.concatenate([xfc.astype(jnp.bfloat16),
                          h_in.astype(jnp.bfloat16)], axis=-1)        # (B, 2*HID)
    g = jnp.dot(xh, wgru_ref[...],
                preferred_element_type=jnp.float32) + bgru_ref[...]   # (B, 6*HID)
    # PyTorch gate order: r, z, n ; columns [0:3H) = gi, [3H:6H) = gh
    r = jax.nn.sigmoid(g[:, 0 * HID:1 * HID] + g[:, 3 * HID:4 * HID])
    z = jax.nn.sigmoid(g[:, 1 * HID:2 * HID] + g[:, 4 * HID:5 * HID])
    n = jnp.tanh(g[:, 2 * HID:3 * HID] + r * g[:, 5 * HID:6 * HID])
    h_new = (1.0 - z) * n + z * h_in                                  # (B, HID)

    # ---- fc2 as VPU multiply + lane reduction (no N=1 matmul) ----
    q = jnp.sum(h_new * wfc2_ref[...], axis=-1, keepdims=True) + bfc2_ref[...]  # (B,1)

    # single lane-dense 128-wide output slab: [ h_new | q broadcast over 96 lanes ]
    out_ref[...] = jnp.concatenate(
        [h_new, jnp.broadcast_to(q, (h_new.shape[0], 3 * HID))], axis=-1)


def init_params(key):
    """Deterministic synthetic parameters in PyTorch layouts."""
    ks = jax.random.split(key, 8)

    def rnd(k, shape, scale=0.1):
        return scale * jax.random.normal(k, shape, jnp.float32)

    return {
        # conv1 / conv2 (layer_init -> zero bias)
        "w1":   rnd(ks[0], (C1, CIN, K1, K1)),
        "b1":   jnp.zeros((C1,), jnp.float32),
        "w2":   rnd(ks[1], (C2, C1, K2, K2)),
        "b2":   jnp.zeros((C2,), jnp.float32),
        # fc1
        "wfc1": rnd(ks[2], (HID, FLAT)),
        "bfc1": rnd(ks[3], (HID,), 0.05),
        # GRUCell
        "wih":  rnd(ks[4], (3 * HID, HID)),
        "bih":  rnd(ks[5], (3 * HID,), 0.05),
        "whh":  rnd(ks[6], (3 * HID, HID)),
        "bhh":  rnd(ks[7], (3 * HID,), 0.05),
        # fc2
        "wfc2": rnd(jax.random.fold_in(key, 99), (1, HID)),
        "bfc2": jnp.zeros((1,), jnp.float32),
    }


def prepare_params(p):
    """One-time (hoisted out of the per-step forward) weight preparation.

    Produces block-diagonal / transposed / permuted bf16 matrices so every hot
    op inside the kernel is a plain (B, K) @ (K, N) dot.
    """
    # im2col conv weights (patch lanes ordered (ky, kx, cin))
    w1k = jnp.transpose(p["w1"], (2, 3, 1, 0)).reshape(P1, C1)           # (24, 32)
    w2k = jnp.transpose(p["w2"], (2, 3, 1, 0)).reshape(NK2 * C1, C2)     # (128, 32)
    # fc1 weight permuted so the kernel's (pos-major, channel-minor) flatten
    # reproduces PyTorch's NCHW y.view(B, -1) flatten exactly.
    wfc1k = jnp.transpose(
        p["wfc1"].reshape(HID, C2, OH2, OH2), (2, 3, 1, 0)).reshape(FLAT, HID)

    # block-diagonal conv weights: one dot per conv layer, no in-kernel gathers
    w1_bd = block_diag(*([w1k] * NDUP))        # (NDUP*P1, NDUP*C1) = (384, 512)
    w2_bd = block_diag(*([w2k] * NPOS2))       # (NDUP*C1, FLAT)    = (512, 128)
    # fused GRU weight: [xfc | h] @ blockdiag(Wih^T, Whh^T) = [gi | gh]
    wgru = block_diag(p["wih"].T, p["whh"].T)  # (2*HID, 6*HID)     = (64, 192)

    return (
        w1_bd.astype(jnp.bfloat16),
        jnp.tile(p["b1"], NDUP).reshape(1, -1),                  # (1, 512) f32
        w2_bd.astype(jnp.bfloat16),
        jnp.tile(p["b2"], NPOS2).reshape(1, -1),                 # (1, 128) f32
        wfc1k.astype(jnp.bfloat16),
        p["bfc1"].reshape(1, -1),                                # (1, 32)  f32
        wgru.astype(jnp.bfloat16),
        jnp.concatenate([p["bih"], p["bhh"]]).reshape(1, -1),    # (1, 192) f32
        p["wfc2"].reshape(1, HID).astype(jnp.float32),           # (1, 32)  f32
        p["bfc2"].reshape(1, 1),                                 # (1, 1)   f32
    )


@jax.jit
def forward(obs2d, act2d, hidden, kparams):
    """Per-step forward.  Only per-step glue (concat + im2col gather) runs here;
    all weight layout work lives in prepare_params()."""
    x = jnp.concatenate([obs2d, act2d], axis=1)                  # (B, CIN, 8, 8) NCHW
    x_nhwc = jnp.transpose(x, (0, 2, 3, 1)).astype(jnp.float32)  # (B, 8, 8, CIN)

    # Duplicated im2col: one row per batch element, lanes ordered
    # (conv2 output position p2, conv2 tap k2, conv1 patch (ky, kx, cin)).
    rows = []
    for p2y in range(OH2):
        for p2x in range(OH2):
            for ky in range(K2):
                for kx in range(K2):
                    oy1, ox1 = p2y + ky, p2x + kx            # conv1 output position
                    rows.append(
                        x_nhwc[:, oy1 * S1:oy1 * S1 + K1,
                               ox1 * S1:ox1 * S1 + K1, :].reshape(B, P1))
    patches = jnp.stack(rows, axis=1).reshape(B, NDUP * P1).astype(jnp.bfloat16)

    h_in = hidden.reshape(-1, HID).astype(jnp.float32)
    args = (patches, h_in) + tuple(kparams)

    vmem = pl.BlockSpec(memory_space=pltpu.MemorySpace.VMEM)
    out = pl.pallas_call(
        agent_kernel,
        out_shape=jax.ShapeDtypeStruct((B, 4 * HID), jnp.float32),
        in_specs=[vmem] * len(args),
        out_specs=vmem,
    )(*args)

    q = out[:, HID:HID + 1]
    h = out[:, :HID]
    return q, h


def reference_forward(obs2d, act2d, hidden, p):
    """Pure-JAX reference reproducing the PyTorch module semantics (NCHW, f32)."""
    x = jnp.concatenate([obs2d, act2d], axis=1)
    dn = ("NCHW", "OIHW", "NCHW")
    y = lax.conv_general_dilated(x, p["w1"], (S1, S1), "VALID",
                                 dimension_numbers=dn) + p["b1"][None, :, None, None]
    y = jnp.where(y > 0, y, jnp.exp(jnp.minimum(y, 0.0)) - 1.0)
    y = lax.conv_general_dilated(y, p["w2"], (S2, S2), "VALID",
                                 dimension_numbers=dn) + p["b2"][None, :, None, None]
    y = jnp.where(y > 0, y, jnp.exp(jnp.minimum(y, 0.0)) - 1.0)
    flat = y.reshape(y.shape[0], -1)                       # NCHW flatten
    xfc = jnp.maximum(flat @ p["wfc1"].T + p["bfc1"], 0.0)
    h_in = hidden.reshape(-1, HID)
    gi = xfc @ p["wih"].T + p["bih"]
    gh = h_in @ p["whh"].T + p["bhh"]
    r = jax.nn.sigmoid(gi[:, :HID] + gh[:, :HID])
    z = jax.nn.sigmoid(gi[:, HID:2 * HID] + gh[:, HID:2 * HID])
    n = jnp.tanh(gi[:, 2 * HID:] + r * gh[:, 2 * HID:])
    h = (1.0 - z) * n + z * h_in
    q = h @ p["wfc2"].T + p["bfc2"]
    return q, h


if __name__ == "__main__":
    key = jax.random.PRNGKey(0)
    k_obs, k_act, k_h, k_p = jax.random.split(key, 4)

    obs2d = jax.random.normal(k_obs, (B, CIN_OBS, GRID, GRID), jnp.float32)
    act2d = jax.random.normal(k_act, (B, CIN_ACT, GRID, GRID), jnp.float32)
    h0 = 0.1 * jax.random.normal(k_h, (B, HID), jnp.float32)
    params = init_params(k_p)

    # One-time weight preparation (hoisted out of the per-step forward).
    kparams = jax.tree_util.tree_map(jax.device_put, prepare_params(params))

    q, h = forward(obs2d, act2d, h0, kparams)
    jax.block_until_ready((q, h))

    q_ref, h_ref = reference_forward(obs2d, act2d, h0, params)
    assert q.shape == (B, 1) and h.shape == (B, HID)
    assert jnp.allclose(q, q_ref, atol=5e-2, rtol=5e-2), \
        f"q mismatch, max abs diff = {jnp.max(jnp.abs(q - q_ref))}"
    assert jnp.allclose(h, h_ref, atol=5e-2, rtol=5e-2), \
        f"h mismatch, max abs diff = {jnp.max(jnp.abs(h - h_ref))}"

    print("KERNEL_OK")
</pallas_src>

<mosaic_0001>
module attributes {stable_mosaic.version = 11 : i64} {
  func.func @agent_kernel(%arg0: memref<2x384xbf16, #tpu.memory_space<vmem>>, %arg1: memref<2x32xf32, #tpu.memory_space<vmem>>, %arg2: memref<384x512xbf16, #tpu.memory_space<vmem>>, %arg3: memref<1x512xf32, #tpu.memory_space<vmem>>, %arg4: memref<512x128xbf16, #tpu.memory_space<vmem>>, %arg5: memref<1x128xf32, #tpu.memory_space<vmem>>, %arg6: memref<128x32xbf16, #tpu.memory_space<vmem>>, %arg7: memref<1x32xf32, #tpu.memory_space<vmem>>, %arg8: memref<64x192xbf16, #tpu.memory_space<vmem>>, %arg9: memref<1x192xf32, #tpu.memory_space<vmem>>, %arg10: memref<1x32xf32, #tpu.memory_space<vmem>>, %arg11: memref<1x1xf32, #tpu.memory_space<vmem>>, %arg12: memref<2x128xf32, #tpu.memory_space<vmem>>) attributes {dimension_semantics = [], scalar_prefetch = 0 : i64, scratch_operands = 0 : i64, tpu.core_type = #tpu.core_type<tc>} {
    %c0 = arith.constant 0 : index
    %c0_0 = arith.constant 0 : index
    %0 = vector.load %arg1[%c0, %c0_0] : memref<2x32xf32, #tpu.memory_space<vmem>>, vector<2x32xf32>
    %c0_1 = arith.constant 0 : index
    %c0_2 = arith.constant 0 : index
    %1 = vector.load %arg0[%c0_1, %c0_2] : memref<2x384xbf16, #tpu.memory_space<vmem>>, vector<2x384xbf16>
    %c0_3 = arith.constant 0 : index
    %c0_4 = arith.constant 0 : index
    %2 = vector.load %arg2[%c0_3, %c0_4] : memref<384x512xbf16, #tpu.memory_space<vmem>>, vector<384x512xbf16>
    %cst = arith.constant dense<0.000000e+00> : vector<2x512xf32>
    %3 = tpu.matmul %1, %2, %cst {dimension_numbers = #tpu.dot_dimension_numbers<[1], [0], [0], [1], [0, 0, 1, 1], [], []>} : vector<2x384xbf16>, vector<384x512xbf16>, vector<2x512xf32> -> vector<2x512xf32>
    %c0_5 = arith.constant 0 : index
    %c0_6 = arith.constant 0 : index
    %4 = vector.load %arg3[%c0_5, %c0_6] : memref<1x512xf32, #tpu.memory_space<vmem>>, vector<1x512xf32>
    %5 = vector.broadcast %4 : vector<1x512xf32> to vector<2x512xf32>
    %6 = arith.addf %3, %5 : vector<2x512xf32>
    %cst_7 = arith.constant 0.000000e+00 : f32
    %7 = vector.broadcast %cst_7 : f32 to vector<2x512xf32>
    %8 = arith.cmpf ogt, %6, %7 : vector<2x512xf32>
    %cst_8 = arith.constant 0.000000e+00 : f32
    %9 = vector.broadcast %cst_8 : f32 to vector<2x512xf32>
    %10 = arith.minimumf %6, %9 : vector<2x512xf32>
    %11 = math.exp %10 : vector<2x512xf32>
    %cst_9 = arith.constant 1.000000e+00 : f32
    %12 = vector.broadcast %cst_9 : f32 to vector<2x512xf32>
    %13 = arith.subf %11, %12 : vector<2x512xf32>
    %14 = arith.select %8, %6, %13 : vector<2x512xi1>, vector<2x512xf32>
    %15 = arith.truncf %14 : vector<2x512xf32> to vector<2x512xbf16>
    %c0_10 = arith.constant 0 : index
    %c0_11 = arith.constant 0 : index
    %16 = vector.load %arg4[%c0_10, %c0_11] : memref<512x128xbf16, #tpu.memory_space<vmem>>, vector<512x128xbf16>
    %cst_12 = arith.constant dense<0.000000e+00> : vector<2x128xf32>
    %17 = tpu.matmul %15, %16, %cst_12 {dimension_numbers = #tpu.dot_dimension_numbers<[1], [0], [0], [1], [0, 0, 1, 1], [], []>} : vector<2x512xbf16>, vector<512x128xbf16>, vector<2x128xf32> -> vector<2x128xf32>
    %c0_13 = arith.constant 0 : index
    %c0_14 = arith.constant 0 : index
    %18 = vector.load %arg5[%c0_13, %c0_14] : memref<1x128xf32, #tpu.memory_space<vmem>>, vector<1x128xf32>
    %19 = vector.broadcast %18 : vector<1x128xf32> to vector<2x128xf32>
    %20 = arith.addf %17, %19 : vector<2x128xf32>
    %cst_15 = arith.constant 0.000000e+00 : f32
    %21 = vector.broadcast %cst_15 : f32 to vector<2x128xf32>
    %22 = arith.cmpf ogt, %20, %21 : vector<2x128xf32>
    %cst_16 = arith.constant 0.000000e+00 : f32
    %23 = vector.broadcast %cst_16 : f32 to vector<2x128xf32>
    %24 = arith.minimumf %20, %23 : vector<2x128xf32>
    %25 = math.exp %24 : vector<2x128xf32>
    %cst_17 = arith.constant 1.000000e+00 : f32
    %26 = vector.broadcast %cst_17 : f32 to vector<2x128xf32>
    %27 = arith.subf %25, %26 : vector<2x128xf32>
    %28 = arith.select %22, %20, %27 : vector<2x128xi1>, vector<2x128xf32>
    %29 = arith.truncf %28 : vector<2x128xf32> to vector<2x128xbf16>
    %c0_18 = arith.constant 0 : index
    %c0_19 = arith.constant 0 : index
    %30 = vector.load %arg6[%c0_18, %c0_19] : memref<128x32xbf16, #tpu.memory_space<vmem>>, vector<128x32xbf16>
    %cst_20 = arith.constant dense<0.000000e+00> : vector<2x32xf32>
    %31 = tpu.matmul %29, %30, %cst_20 {dimension_numbers = #tpu.dot_dimension_numbers<[1], [0], [0], [1], [0, 0, 1, 1], [], []>} : vector<2x128xbf16>, vector<128x32xbf16>, vector<2x32xf32> -> vector<2x32xf32>
    %c0_21 = arith.constant 0 : index
    %c0_22 = arith.constant 0 : index
    %32 = vector.load %arg7[%c0_21, %c0_22] : memref<1x32xf32, #tpu.memory_space<vmem>>, vector<1x32xf32>
    %33 = vector.broadcast %32 : vector<1x32xf32> to vector<2x32xf32>
    %34 = arith.addf %31, %33 : vector<2x32xf32>
    %cst_23 = arith.constant 0.000000e+00 : f32
    %35 = vector.broadcast %cst_23 : f32 to vector<2x32xf32>
    %36 = arith.maximumf %34, %35 : vector<2x32xf32>
    %37 = arith.truncf %36 : vector<2x32xf32> to vector<2x32xbf16>
    %38 = arith.truncf %0 : vector<2x32xf32> to vector<2x32xbf16>
    %39 = tpu.concatenate %37, %38 in 1 : vector<2x32xbf16>, vector<2x32xbf16> -> vector<2x64xbf16>
    %c0_24 = arith.constant 0 : index
    %c0_25 = arith.constant 0 : index
    %40 = vector.load %arg8[%c0_24, %c0_25] : memref<64x192xbf16, #tpu.memory_space<vmem>>, vector<64x192xbf16>
    %cst_26 = arith.constant dense<0.000000e+00> : vector<2x192xf32>
    %41 = tpu.matmul %39, %40, %cst_26 {dimension_numbers = #tpu.dot_dimension_numbers<[1], [0], [0], [1], [0, 0, 1, 1], [], []>} : vector<2x64xbf16>, vector<64x192xbf16>, vector<2x192xf32> -> vector<2x192xf32>
    %c0_27 = arith.constant 0 : index
    %c0_28 = arith.constant 0 : index
    %42 = vector.load %arg9[%c0_27, %c0_28] : memref<1x192xf32, #tpu.memory_space<vmem>>, vector<1x192xf32>
    %43 = vector.broadcast %42 : vector<1x192xf32> to vector<2x192xf32>
    %44 = arith.addf %41, %43 : vector<2x192xf32>
    %45 = vector.extract_strided_slice %44 {offsets = [0, 0], sizes = [2, 32], strides = [1, 1]} : vector<2x192xf32> to vector<2x32xf32>
    %46 = vector.extract_strided_slice %44 {offsets = [0, 96], sizes = [2, 32], strides = [1, 1]} : vector<2x192xf32> to vector<2x32xf32>
    %47 = arith.addf %45, %46 : vector<2x32xf32>
    %48 = arith.negf %47 : vector<2x32xf32>
    %49 = math.exp %48 : vector<2x32xf32>
    %cst_29 = arith.constant 1.000000e+00 : f32
    %50 = vector.broadcast %cst_29 : f32 to vector<2x32xf32>
    %51 = arith.addf %50, %49 : vector<2x32xf32>
    %52 = arith.divf %50, %51 : vector<2x32xf32>
    %53 = vector.extract_strided_slice %44 {offsets = [0, 32], sizes = [2, 32], strides = [1, 1]} : vector<2x192xf32> to vector<2x32xf32>
    %54 = vector.extract_strided_slice %44 {offsets = [0, 128], sizes = [2, 32], strides = [1, 1]} : vector<2x192xf32> to vector<2x32xf32>
    %55 = arith.addf %53, %54 : vector<2x32xf32>
    %56 = arith.negf %55 : vector<2x32xf32>
    %57 = math.exp %56 : vector<2x32xf32>
    %cst_30 = arith.constant 1.000000e+00 : f32
    %58 = vector.broadcast %cst_30 : f32 to vector<2x32xf32>
    %59 = arith.addf %58, %57 : vector<2x32xf32>
    %60 = arith.divf %58, %59 : vector<2x32xf32>
    %61 = vector.extract_strided_slice %44 {offsets = [0, 64], sizes = [2, 32], strides = [1, 1]} : vector<2x192xf32> to vector<2x32xf32>
    %62 = vector.extract_strided_slice %44 {offsets = [0, 160], sizes = [2, 32], strides = [1, 1]} : vector<2x192xf32> to vector<2x32xf32>
    %63 = arith.mulf %52, %62 : vector<2x32xf32>
    %64 = arith.addf %61, %63 : vector<2x32xf32>
    %65 = math.tanh %64 : vector<2x32xf32>
    %cst_31 = arith.constant 1.000000e+00 : f32
    %66 = vector.broadcast %cst_31 : f32 to vector<2x32xf32>
    %67 = arith.subf %66, %60 : vector<2x32xf32>
    %68 = arith.mulf %67, %65 : vector<2x32xf32>
    %69 = arith.mulf %60, %0 : vector<2x32xf32>
    %70 = arith.addf %68, %69 : vector<2x32xf32>
    %c0_32 = arith.constant 0 : index
    %c0_33 = arith.constant 0 : index
    %71 = vector.load %arg10[%c0_32, %c0_33] : memref<1x32xf32, #tpu.memory_space<vmem>>, vector<1x32xf32>
    %72 = vector.broadcast %71 : vector<1x32xf32> to vector<2x32xf32>
    %73 = arith.mulf %70, %72 : vector<2x32xf32>
    %cst_34 = arith.constant dense<0.000000e+00> : vector<2xf32>
    %74 = vector.multi_reduction <add>, %73, %cst_34 [1] : vector<2x32xf32> to vector<2xf32>
    %75 = vector.shape_cast %74 : vector<2xf32> to vector<2x1xf32>
    %c0_35 = arith.constant 0 : index
    %c0_36 = arith.constant 0 : index
    %76 = vector.load %arg11[%c0_35, %c0_36] : memref<1x1xf32, #tpu.memory_space<vmem>>, vector<1x1xf32>
    %77 = vector.broadcast %76 : vector<1x1xf32> to vector<2x1xf32>
    %78 = arith.addf %75, %77 : vector<2x1xf32>
    %79 = vector.shape_cast %78 : vector<2x1xf32> to vector<2x1xf32>
    %80 = vector.broadcast %79 : vector<2x1xf32> to vector<2x96xf32>
    %81 = tpu.concatenate %70, %80 in 1 : vector<2x32xf32>, vector<2x96xf32> -> vector<2x128xf32>
    %c0_37 = arith.constant 0 : index
    %c0_38 = arith.constant 0 : index
    %82 = vector.load %arg12[%c0_37, %c0_38] : memref<2x128xf32, #tpu.memory_space<vmem>>, vector<2x128xf32>
    tpu.vector_store %arg12[%c0_37, %c0_38], %81 {strides = array<i32>} : memref<2x128xf32, #tpu.memory_space<vmem>>, vector<2x128xf32>,
    return
  }
}

</mosaic_0001>

<llo_original>
// kernel: forward.1
$region0: #{forward.1}
  #allocation0 [shape = 'u32[]', space=smem, size = 0x4, offset = 0x4, fixed_abs, tag = 'smem constant byte address 0x4 - core index']
  #allocation1 [shape = 'u32[144,128]{1,0:T(1,128)}', space=vmem, size = 0x12000, scoped, tag = 'internal scratch']
  #allocation2 [shape = 'f32[1,1]{1,0:T(1,128)S(1)}', space=vmem, size = 0x200, scoped, tag = 'scoped memory for forward.1']
  %s0 = inlined_call_operand.vmem [shape: bf16[2,384], index: 0, kind: input, shape index: {}]
  %s1 = inlined_call_operand.hbm [shape: f32[2,32], index: 1, kind: input, shape index: {}]
  %s2 = inlined_call_operand.vmem [shape: bf16[384,512], index: 2, kind: input, shape index: {}]
  %s3 = inlined_call_operand.hbm [shape: f32[1,512], index: 3, kind: input, shape index: {}]
  %s4 = inlined_call_operand.hbm [shape: bf16[512,128], index: 4, kind: input, shape index: {}]
  %s5 = inlined_call_operand.hbm [shape: f32[1,128], index: 5, kind: input, shape index: {}]
  %s6 = inlined_call_operand.vmem [shape: bf16[128,32], index: 6, kind: input, shape index: {}]
  %s7 = inlined_call_operand.hbm [shape: f32[1,32], index: 7, kind: input, shape index: {}]
  %s8 = inlined_call_operand.hbm [shape: bf16[64,192], index: 8, kind: input, shape index: {}]
  %s9 = inlined_call_operand.hbm [shape: f32[1,192], index: 9, kind: input, shape index: {}]
  %s10 = inlined_call_operand.hbm [shape: f32[1,32], index: 10, kind: input, shape index: {}]
  %s11 = inlined_call_operand.<no memory space> [shape: f32[1,1], index: 11, kind: input, shape index: {}]
  %s12 = inlined_call_operand.vmem [shape: f32[2,128], index: 12, kind: output, shape index: {}]
  %s13 = sld [smem:[#allocation0]]
  $region90: #{forward.1} parent=0
    _
  %s15 = ssub.s32 1, %s13
  %s16 = scalar_select 0, %s15, %s13
  %v17 = vstv %s11
  %18 = vst [vmem:[#allocation2] sm:$0x1] %v17
  $region1: #{forward.1} parent=0
    #allocation3 [shape = 'u8[1024]{0}', space=vmem, size = 0x400, scoped, tag = 'input window, operand 1, single buffered']
    #allocation4 [shape = 's32[1]{0}', space=sflag, size = 0x4, scoped, tag = 'scoped memory for forward.1']
    #allocation5 [shape = 'u8[2048]{0}', space=vmem, size = 0x800, scoped, tag = 'input window, operand 3, single buffered']
    #allocation6 [shape = 's32[1]{0}', space=sflag, size = 0x4, scoped, tag = 'scoped memory for forward.1']
    #allocation7 [shape = 'u8[131072]{0}', space=vmem, size = 0x20000, scoped, tag = 'input window, operand 4, single buffered']
    #allocation8 [shape = 'u8[512]{0}', space=vmem, size = 0x400, scoped, tag = 'input window, operand 5, single buffered']
    #allocation9 [shape = 's32[1]{0}', space=sflag, size = 0x4, scoped, tag = 'scoped memory for forward.1']
    #allocation10 [shape = 'u8[512]{0}', space=vmem, size = 0x400, scoped, tag = 'input window, operand 7, single buffered']
    #allocation11 [shape = 'u8[32768]{0}', space=vmem, size = 0x8000, scoped, tag = 'input window, operand 8, single buffered']
    #allocation12 [shape = 's32[1]{0}', space=sflag, size = 0x4, scoped, tag = 'scoped memory for forward.1']
    #allocation13 [shape = 'u8[1024]{0}', space=vmem, size = 0x400, scoped, tag = 'input window, operand 9, single buffered']
    #allocation14 [shape = 'u8[512]{0}', space=vmem, size = 0x400, scoped, tag = 'input window, operand 10, single buffered']
    #allocation15 [shape = 's32[1]{0}', space=sflag, size = 0x4, scoped, tag = 'scoped memory for forward.1']
    %19 = vsyncpa [#allocation4], 0
    %20 = vsyncpa [#allocation6], 0
    %21 = vsyncpa [#allocation9], 0
    %22 = vsyncpa [#allocation12], 0
    %23 = vsyncpa [#allocation15], 0
    // Predicated region
    $region2: #{forward.1} parent=1 // pred_check
      _
    $region3: #{forward.1} parent=1 // pred_check_branch
      %25 = sbr.rel (0) target = $region5
    $region4: #{forward.1} parent=1 // pred_region
      _
    $region5: #{forward.1} parent=1 // pred_fallthru
      _
    // Predicated region
    $region6: #{forward.1} parent=1 // pred_check
      _
    $region7: #{forward.1} parent=1 // pred_check_branch
      %27 = sbr.rel (0) target = $region9
    $region8: #{forward.1} parent=1 // pred_region
      %s29 = ssub.s32 32, 32
      %30 = vsyncadd [#allocation4], %s29
      %s32 = sshll.u32 [#allocation3], 4
      %s33 = int_to_ptr.vmem [resolvable:$true] %s32
      %35 = dma.hbm_to_vmem [thread:$0]  %s1, 32, %s33, [#allocation4]
    $region9: #{forward.1} parent=1 // pred_fallthru
      _
    // Predicated region
    $region10: #{forward.1} parent=1 // pred_check
      _
    $region11: #{forward.1} parent=1 // pred_check_branch
      %37 = sbr.rel (0) target = $region13
    $region12: #{forward.1} parent=1 // pred_region
      _
    $region13: #{forward.1} parent=1 // pred_fallthru
      _
    // Predicated region
    $region14: #{forward.1} parent=1 // pred_check
      _
    $region15: #{forward.1} parent=1 // pred_check_branch
      %39 = sbr.rel (0) target = $region17
    $region16: #{forward.1} parent=1 // pred_region
      %s41 = ssub.s32 64, 64
      %42 = vsyncadd [#allocation6], %s41
      %s44 = sshll.u32 [#allocation5], 4
      %s45 = int_to_ptr.vmem [resolvable:$true] %s44
      %47 = dma.hbm_to_vmem [thread:$0]  %s3, 64, %s45, [#allocation6]
    $region17: #{forward.1} parent=1 // pred_fallthru
      _
    // Predicated region
    $region18: #{forward.1} parent=1 // pred_check
      _
    $region19: #{forward.1} parent=1 // pred_check_branch
      %49 = sbr.rel (0) target = $region21
    $region20: #{forward.1} parent=1 // pred_region
      %s51 = ssub.s32 4096, 4096
      %52 = vsyncadd [#allocation6], %s51
      %s53 = sshll.u32 [#allocation7], 4
      %s54 = int_to_ptr.vmem [resolvable:$true] %s53
      %59 = dma.hbm_to_vmem [thread:$0]  %s4, 4096, %s54, [#allocation6], 64, 64, 4
    $region21: #{forward.1} parent=1 // pred_fallthru
      _
    // Predicated region
    $region22: #{forward.1} parent=1 // pred_check
      _
    $region23: #{forward.1} parent=1 // pred_check_branch
      %61 = sbr.rel (0) target = $region25
    $region24: #{forward.1} parent=1 // pred_region
      %s63 = ssub.s32 16, 16
      %64 = vsyncadd [#allocation9], %s63
      %s66 = sshll.u32 [#allocation8], 4
      %s67 = int_to_ptr.vmem [resolvable:$true] %s66
      %69 = dma.hbm_to_vmem [thread:$0]  %s5, 16, %s67, [#allocation9]
    $region25: #{forward.1} parent=1 // pred_fallthru
      _
    // Predicated region
    $region26: #{forward.1} parent=1 // pred_check
      _
    $region27: #{forward.1} parent=1 // pred_check_branch
      %71 = sbr.rel (0) target = $region29
    $region28: #{forward.1} parent=1 // pred_region
      _
    $region29: #{forward.1} parent=1 // pred_fallthru
      _
    // Predicated region
    $region30: #{forward.1} parent=1 // pred_check
      _
    $region31: #{forward.1} parent=1 // pred_check_branch
      %73 = sbr.rel (0) target = $region33
    $region32: #{forward.1} parent=1 // pred_region
      %s75 = ssub.s32 16, 16
      %76 = vsyncadd [#allocation9], %s75
      %s78 = sshll.u32 [#allocation10], 4
      %s79 = int_to_ptr.vmem [resolvable:$true] %s78
      %81 = dma.hbm_to_vmem [thread:$0]  %s7, 16, %s79, [#allocation9]
    $region33: #{forward.1} parent=1 // pred_fallthru
      _
    // Predicated region
    $region34: #{forward.1} parent=1 // pred_check
      _
    $region35: #{forward.1} parent=1 // pred_check_branch
      %83 = sbr.rel (0) target = $region37
    $region36: #{forward.1} parent=1 // pred_region
      %s85 = ssub.s32 1024, 1024
      %86 = vsyncadd [#allocation12], %s85
      %s87 = sshll.u32 [#allocation11], 4
      %s88 = int_to_ptr.vmem [resolvable:$true] %s87
      %93 = dma.hbm_to_vmem [thread:$0]  %s8, 1024, %s88, [#allocation12], 128, 128, 8
    $region37: #{forward.1} parent=1 // pred_fallthru
      _
    // Predicated region
    $region38: #{forward.1} parent=1 // pred_check
      _
    $region39: #{forward.1} parent=1 // pred_check_branch
      %95 = sbr.rel (0) target = $region41
    $region40: #{forward.1} parent=1 // pred_region
      %s97 = ssub.s32 32, 32
      %98 = vsyncadd [#allocation12], %s97
      %s100 = sshll.u32 [#allocation13], 4
      %s101 = int_to_ptr.vmem [resolvable:$true] %s100
      %103 = dma.hbm_to_vmem [thread:$0]  %s9, 32, %s101, [#allocation12]
    $region41: #{forward.1} parent=1 // pred_fallthru
      _
    // Predicated region
    $region42: #{forward.1} parent=1 // pred_check
      _
    $region43: #{forward.1} parent=1 // pred_check_branch
      %105 = sbr.rel (0) target = $region45
    $region44: #{forward.1} parent=1 // pred_region
      %s107 = ssub.s32 16, 16
      %108 = vsyncadd [#allocation15], %s107
      %s110 = sshll.u32 [#allocation14], 4
      %s111 = int_to_ptr.vmem [resolvable:$true] %s110
      %113 = dma.hbm_to_vmem [thread:$0]  %s10, 16, %s111, [#allocation15]
    $region45: #{forward.1} parent=1 // pred_fallthru
      _
    // Predicated region
    $region46: #{forward.1} parent=1 // pred_check
      _
    $region47: #{forward.1} parent=1 // pred_check_branch
      %115 = sbr.rel (0) target = $region49
    $region48: #{forward.1} parent=1 // pred_region
      _
    $region49: #{forward.1} parent=1 // pred_fallthru
      _
    // Predicated region
    $region50: #{forward.1} parent=1 // pred_check
      _
    $region51: #{forward.1} parent=1 // pred_check_branch
      %117 = sbr.rel (0) target = $region53
    $region52: #{forward.1} parent=1 // pred_region
      %118 = dma.done [#allocation4], 32
    $region53: #{forward.1} parent=1 // pred_fallthru
      _
    // Predicated region
    $region54: #{forward.1} parent=1 // pred_check
      _
    $region55: #{forward.1} parent=1 // pred_check_branch
      %120 = sbr.rel (0) target = $region57
    $region56: #{forward.1} parent=1 // pred_region
      %121 = dma.done [#allocation6], 64
    $region57: #{forward.1} parent=1 // pred_fallthru
      _
    // Predicated region
    $region58: #{forward.1} parent=1 // pred_check
      _
    $region59: #{forward.1} parent=1 // pred_check_branch
      %123 = sbr.rel (0) target = $region61
    $region60: #{forward.1} parent=1 // pred_region
      %124 = dma.done [#allocation6], 4096
    $region61: #{forward.1} parent=1 // pred_fallthru
      _
    // Predicated region
    $region62: #{forward.1} parent=1 // pred_check
      _
    $region63: #{forward.1} parent=1 // pred_check_branch
      %126 = sbr.rel (0) target = $region65
    $region64: #{forward.1} parent=1 // pred_region
      %127 = dma.done [#allocation9], 16
    $region65: #{forward.1} parent=1 // pred_fallthru
      _
    // Predicated region
    $region66: #{forward.1} parent=1 // pred_check
      _
    $region67: #{forward.1} parent=1 // pred_check_branch
      %129 = sbr.rel (0) target = $region69
    $region68: #{forward.1} parent=1 // pred_region
      %130 = dma.done [#allocation9], 16
    $region69: #{forward.1} parent=1 // pred_fallthru
      _
    // Predicated region
    $region70: #{forward.1} parent=1 // pred_check
      _
    $region71: #{forward.1} parent=1 // pred_check_branch
      %132 = sbr.rel (0) target = $region73
    $region72: #{forward.1} parent=1 // pred_region
      %133 = dma.done [#allocation12], 1024
    $region73: #{forward.1} parent=1 // pred_fallthru
      _
    // Predicated region
    $region74: #{forward.1} parent=1 // pred_check
      _
    $region75: #{forward.1} parent=1 // pred_check_branch
      %135 = sbr.rel (0) target = $region77
    $region76: #{forward.1} parent=1 // pred_region
      %136 = dma.done [#allocation12], 32
    $region77: #{forward.1} parent=1 // pred_fallthru
      _
    // Predicated region
    $region78: #{forward.1} parent=1 // pred_check
      _
    $region79: #{forward.1} parent=1 // pred_check_branch
      %138 = sbr.rel (0) target = $region81
    $region80: #{forward.1} parent=1 // pred_region
      %139 = dma.done [#allocation15], 16
    $region81: #{forward.1} parent=1 // pred_fallthru
      _
    %v141 = vld [vmem:[#allocation3] sm:$0x3]
    %v142 = vld [vmem:[%s0] sm:$0x7]
    %v143 = vld [vmem:[%s2] sm:$0xff]
    %v144 = vld [vmem:[%s2 + $0x8] sm:$0xff]
    %v145 = vld [vmem:[%s2 + $0x10] sm:$0xff]
    %v146 = vld [vmem:[%s2 + $0x18] sm:$0xff]
    %v147 = vld [vmem:[%s2 + $0x20] sm:$0xff]
    %v148 = vld [vmem:[%s2 + $0x28] sm:$0xff]
    %v149 = vld [vmem:[%s2 + $0x30] sm:$0xff]
    %v150 = vld [vmem:[%s2 + $0x38] sm:$0xff]
    %v151 = vld [vmem:[%s2 + $0x40] sm:$0xff]
    %v152 = vld [vmem:[%s2 + $0x48] sm:$0xff]
    %v153 = vld [vmem:[%s2 + $0x50] sm:$0xff]
    %v154 = vld [vmem:[%s2 + $0x58] sm:$0xff]
    %v155 = vld [vmem:[%s2 + $0x60] sm:$0xff]
    %v156 = vld [vmem:[%s2 + $0x68] sm:$0xff]
    %v157 = vld [vmem:[%s2 + $0x70] sm:$0xff]
    %v158 = vld [vmem:[%s2 + $0x78] sm:$0xff]
    %v159 = vld [vmem:[%s2 + $0x80] sm:$0xff]
    %v160 = vld [vmem:[%s2 + $0x88] sm:$0xff]
    %v161 = vld [vmem:[%s2 + $0x90] sm:$0xff]
    %v162 = vld [vmem:[%s2 + $0x98] sm:$0xff]
    %v163 = vld [vmem:[%s2 + $0xa0] sm:$0xff]
    %v164 = vld [vmem:[%s2 + $0xa8] sm:$0xff]
    %v165 = vld [vmem:[%s2 + $0xb0] sm:$0xff]
    %v166 = vld [vmem:[%s2 + $0xb8] sm:$0xff]
    %v167 = vld [vmem:[%s2 + $0xc0] sm:$0xff]
    %v168 = vld [vmem:[%s2 + $0xc8] sm:$0xff]
    %v169 = vld [vmem:[%s2 + $0xd0] sm:$0xff]
    %v170 = vld [vmem:[%s2 + $0xd8] sm:$0xff]
    %v171 = vld [vmem:[%s2 + $0xe0] sm:$0xff]
    %v172 = vld [vmem:[%s2 + $0xe8] sm:$0xff]
    %v173 = vld [vmem:[%s2 + $0xf0] sm:$0xff]
    %v174 = vld [vmem:[%s2 + $0xf8] sm:$0xff]
    %v175 = vld [vmem:[%s2 + $0x100] sm:$0xff]
    %v176 = vld [vmem:[%s2 + $0x108] sm:$0xff]
    %v177 = vld [vmem:[%s2 + $0x110] sm:$0xff]
    %v178 = vld [vmem:[%s2 + $0x118] sm:$0xff]
    %v179 = vld [vmem:[%s2 + $0x120] sm:$0xff]
    %v180 = vld [vmem:[%s2 + $0x128] sm:$0xff]
    %v181 = vld [vmem:[%s2 + $0x130] sm:$0xff]
    %v182 = vld [vmem:[%s2 + $0x138] sm:$0xff]
    %v183 = vld [vmem:[%s2 + $0x140] sm:$0xff]
    %v184 = vld [vmem:[%s2 + $0x148] sm:$0xff]
    %v185 = vld [vmem:[%s2 + $0x150] sm:$0xff]
    %v186 = vld [vmem:[%s2 + $0x158] sm:$0xff]
    %v187 = vld [vmem:[%s2 + $0x160] sm:$0xff]
    %v188 = vld [vmem:[%s2 + $0x168] sm:$0xff]
    %v189 = vld [vmem:[%s2 + $0x170] sm:$0xff]
    %v190 = vld [vmem:[%s2 + $0x178] sm:$0xff]
    %v191 = vld [vmem:[%s2 + $0x180] sm:$0xff]
    %v192 = vld [vmem:[%s2 + $0x188] sm:$0xff]
    %v193 = vld [vmem:[%s2 + $0x190] sm:$0xff]
    %v194 = vld [vmem:[%s2 + $0x198] sm:$0xff]
    %v195 = vld [vmem:[%s2 + $0x1a0] sm:$0xff]
    %v196 = vld [vmem:[%s2 + $0x1a8] sm:$0xff]
    %v197 = vld [vmem:[%s2 + $0x1b0] sm:$0xff]
    %v198 = vld [vmem:[%s2 + $0x1b8] sm:$0xff]
    %v199 = vld [vmem:[%s2 + $0x1c0] sm:$0xff]
    %v200 = vld [vmem:[%s2 + $0x1c8] sm:$0xff]
    %v201 = vld [vmem:[%s2 + $0x1d0] sm:$0xff]
    %v202 = vld [vmem:[%s2 + $0x1d8] sm:$0xff]
    %v203 = vld [vmem:[%s2 + $0x1e0] sm:$0xff]
    %v204 = vld [vmem:[%s2 + $0x1e8] sm:$0xff]
    %v205 = vld [vmem:[%s2 + $0x1f0] sm:$0xff]
    %v206 = vld [vmem:[%s2 + $0x1f8] sm:$0xff]
    %v207 = vld [vmem:[%s2 + $0x200] sm:$0xff]
    %v208 = vld [vmem:[%s2 + $0x208] sm:$0xff]
    %v209 = vld [vmem:[%s2 + $0x210] sm:$0xff]
    %v210 = vld [vmem:[%s2 + $0x218] sm:$0xff]
    %v211 = vld [vmem:[%s2 + $0x220] sm:$0xff]
    %v212 = vld [vmem:[%s2 + $0x228] sm:$0xff]
    %v213 = vld [vmem:[%s2 + $0x230] sm:$0xff]
    %v214 = vld [vmem:[%s2 + $0x238] sm:$0xff]
    %v215 = vld [vmem:[%s2 + $0x240] sm:$0xff]
    %v216 = vld [vmem:[%s2 + $0x248] sm:$0xff]
    %v217 = vld [vmem:[%s2 + $0x250] sm:$0xff]
    %v218 = vld [vmem:[%s2 + $0x258] sm:$0xff]
    %v219 = vld [vmem:[%s2 + $0x260] sm:$0xff]
    %v220 = vld [vmem:[%s2 + $0x268] sm:$0xff]
    %v221 = vld [vmem:[%s2 + $0x270] sm:$0xff]
    %v222 = vld [vmem:[%s2 + $0x278] sm:$0xff]
    %v223 = vld [vmem:[%s2 + $0x280] sm:$0xff]
    %v224 = vld [vmem:[%s2 + $0x288] sm:$0xff]
    %v225 = vld [vmem:[%s2 + $0x290] sm:$0xff]
    %v226 = vld [vmem:[%s2 + $0x298] sm:$0xff]
    %v227 = vld [vmem:[%s2 + $0x2a0] sm:$0xff]
    %v228 = vld [vmem:[%s2 + $0x2a8] sm:$0xff]
    %v229 = vld [vmem:[%s2 + $0x2b0] sm:$0xff]
    %v230 = vld [vmem:[%s2 + $0x2b8] sm:$0xff]
    %v231 = vld [vmem:[%s2 + $0x2c0] sm:$0xff]
    %v232 = vld [vmem:[%s2 + $0x2c8] sm:$0xff]
    %v233 = vld [vmem:[%s2 + $0x2d0] sm:$0xff]
    %v234 = vld [vmem:[%s2 + $0x2d8] sm:$0xff]
    %v235 = vld [vmem:[%s2 + $0x2e0] sm:$0xff]
    %v236 = vld [vmem:[%s2 + $0x2e8] sm:$0xff]
    %v237 = vld [vmem:[%s2 + $0x2f0] sm:$0xff]
    %v238 = vld [vmem:[%s2 + $0x2f8] sm:$0xff]
    %v239 = vld [vmem:[#allocation5] sm:$0xf]
    %v241 = vlaneseq
    %v242 = vshrl.u32 %v241, 7
    %v243 = vsub.s32 0, %v242
    %v244 = vrot.slane %v239, %v243
    %v245 = vlaneseq
    %v246 = vshrl.u32 %v245, 7
    %v247 = vsub.s32 1, %v246
    %v248 = vrot.slane %v239, %v247
    %v249 = vlaneseq
    %v250 = vshrl.u32 %v249, 7
    %v251 = vsub.s32 2, %v250
    %v252 = vrot.slane %v239, %v251
    %v253 = vlaneseq
    %v254 = vshrl.u32 %v253, 7
    %v255 = vsub.s32 3, %v254
    %v256 = vrot.slane %v239, %v255
    %v263 = vunpack.c.l.s4 1966171168
    %v264 = vunpack.c.0.s8 %v263
    %v265 = vlaneseq
    %v266 = vshrl.u32 %v265, 7
    %v267 = vsub.s32 %v264, %v266
    %v268 = vrot.slane %v142, %v267
    %v269 = vcombine.high %v268, %v268
    %v271 = vunpack.c.l.s4 1966171168
    %v272 = vunpack.c.0.s8 %v271
    %v273 = vlaneseq
    %v274 = vshrl.u32 %v273, 7
    %v275 = vsub.s32 %v272, %v274
    %v276 = vrot.slane %v268, %v275
    %v278 = vunpack.c.l.s4 1966171168
    %v279 = vunpack.c.0.s8 %v278
    %v280 = vlaneseq
    %v281 = vshrl.u32 %v280, 7
    %v282 = vsub.s32 %v279, %v281
    %v283 = vrot.slane %v269, %v282
    %v284 = vcombine.high %v276, %v276
    %v384 = vunpack.c.l.b16 %v143
    %v385 = vunpack.c.h.b16 %v143
    %v386 = vunpack.c.l.b16 %v144
    %v387 = vunpack.c.h.b16 %v144
    %v388 = vunpack.c.l.b16 %v145
    %v389 = vunpack.c.h.b16 %v145
    %v390 = vunpack.c.l.b16 %v146
    %v391 = vunpack.c.h.b16 %v146
    %v392 = vunpack.c.l.b16 %v147
    %v393 = vunpack.c.h.b16 %v147
    %v394 = vunpack.c.l.b16 %v148
    %v395 = vunpack.c.h.b16 %v148
    %v396 = vunpack.c.l.b16 %v149
    %v397 = vunpack.c.h.b16 %v149
    %v398 = vunpack.c.l.b16 %v150
    %v399 = vunpack.c.h.b16 %v150
    %v400 = vunpack.c.l.b16 %v151
    %v401 = vunpack.c.h.b16 %v151
    %v402 = vunpack.c.l.b16 %v152
    %v403 = vunpack.c.h.b16 %v152
    %v404 = vunpack.c.l.b16 %v153
    %v405 = vunpack.c.h.b16 %v153
    %v406 = vunpack.c.l.b16 %v154
    %v407 = vunpack.c.h.b16 %v154
    %v408 = vunpack.c.l.b16 %v155
    %v409 = vunpack.c.h.b16 %v155
    %v410 = vunpack.c.l.b16 %v156
    %v411 = vunpack.c.h.b16 %v156
    %v412 = vunpack.c.l.b16 %v157
    %v413 = vunpack.c.h.b16 %v157
    %v414 = vunpack.c.l.b16 %v158
    %v415 = vunpack.c.h.b16 %v158
    %v416 = vunpack.c.l.b16 %v159
    %v417 = vunpack.c.h.b16 %v159
    %v418 = vunpack.c.l.b16 %v160
    %v419 = vunpack.c.h.b16 %v160
    %v420 = vunpack.c.l.b16 %v161
    %v421 = vunpack.c.h.b16 %v161
    %v422 = vunpack.c.l.b16 %v162
    %v423 = vunpack.c.h.b16 %v162
    %v424 = vunpack.c.l.b16 %v163
    %v425 = vunpack.c.h.b16 %v163
    %v426 = vunpack.c.l.b16 %v164
    %v427 = vunpack.c.h.b16 %v164
    %v428 = vunpack.c.l.b16 %v165
    %v429 = vunpack.c.h.b16 %v165
    %v430 = vunpack.c.l.b16 %v166
    %v431 = vunpack.c.h.b16 %v166
    %v432 = vunpack.c.l.b16 %v167
    %v433 = vunpack.c.h.b16 %v167
    %v434 = vunpack.c.l.b16 %v168
    %v435 = vunpack.c.h.b16 %v168
    %v436 = vunpack.c.l.b16 %v169
    %v437 = vunpack.c.h.b16 %v169
    %v438 = vunpack.c.l.b16 %v170
    %v439 = vunpack.c.h.b16 %v170
    %v440 = vunpack.c.l.b16 %v171
    %v441 = vunpack.c.h.b16 %v171
    %v442 = vunpack.c.l.b16 %v172
    %v443 = vunpack.c.h.b16 %v172
    %v444 = vunpack.c.l.b16 %v173
    %v445 = vunpack.c.h.b16 %v173
    %v446 = vunpack.c.l.b16 %v174
    %v447 = vunpack.c.h.b16 %v174
    %v448 = vunpack.c.l.b16 %v175
    %v449 = vunpack.c.h.b16 %v175
    %v450 = vunpack.c.l.b16 %v176
    %v451 = vunpack.c.h.b16 %v176
    %v452 = vunpack.c.l.b16 %v177
    %v453 = vunpack.c.h.b16 %v177
    %v454 = vunpack.c.l.b16 %v178
    %v455 = vunpack.c.h.b16 %v178
    %v456 = vunpack.c.l.b16 %v179
    %v457 = vunpack.c.h.b16 %v179
    %v458 = vunpack.c.l.b16 %v180
    %v459 = vunpack.c.h.b16 %v180
    %v460 = vunpack.c.l.b16 %v181
    %v461 = vunpack.c.h.b16 %v181
    %v462 = vunpack.c.l.b16 %v182
    %v463 = vunpack.c.h.b16 %v182
    %v464 = vunpack.c.l.b16 %v183
    %v465 = vunpack.c.h.b16 %v183
    %v466 = vunpack.c.l.b16 %v184
    %v467 = vunpack.c.h.b16 %v184
    %v468 = vunpack.c.l.b16 %v185
    %v469 = vunpack.c.h.b16 %v185
    %v470 = vunpack.c.l.b16 %v186
    %v471 = vunpack.c.h.b16 %v186
    %v472 = vunpack.c.l.b16 %v187
    %v473 = vunpack.c.h.b16 %v187
    %v474 = vunpack.c.l.b16 %v188
    %v475 = vunpack.c.h.b16 %v188
    %v476 = vunpack.c.l.b16 %v189
    %v477 = vunpack.c.h.b16 %v189
    %v478 = vunpack.c.l.b16 %v190
    %v479 = vunpack.c.h.b16 %v190
    %v480 = vunpack.c.l.b16 %v191
    %v481 = vunpack.c.h.b16 %v191
    %v482 = vunpack.c.l.b16 %v192
    %v483 = vunpack.c.h.b16 %v192
    %v484 = vunpack.c.l.b16 %v193
    %v485 = vunpack.c.h.b16 %v193
    %v486 = vunpack.c.l.b16 %v194
    %v487 = vunpack.c.h.b16 %v194
    %v488 = vunpack.c.l.b16 %v195
    %v489 = vunpack.c.h.b16 %v195
    %v490 = vunpack.c.l.b16 %v196
    %v491 = vunpack.c.h.b16 %v196
    %v492 = vunpack.c.l.b16 %v197
    %v493 = vunpack.c.h.b16 %v197
    %v494 = vunpack.c.l.b16 %v198
    %v495 = vunpack.c.h.b16 %v198
    %v496 = vunpack.c.l.b16 %v199
    %v497 = vunpack.c.h.b16 %v199
    %v498 = vunpack.c.l.b16 %v200
    %v499 = vunpack.c.h.b16 %v200
    %v500 = vunpack.c.l.b16 %v201
    %v501 = vunpack.c.h.b16 %v201
    %v502 = vunpack.c.l.b16 %v202
    %v503 = vunpack.c.h.b16 %v202
    %v504 = vunpack.c.l.b16 %v203
    %v505 = vunpack.c.h.b16 %v203
    %v506 = vunpack.c.l.b16 %v204
    %v507 = vunpack.c.h.b16 %v204
    %v508 = vunpack.c.l.b16 %v205
    %v509 = vunpack.c.h.b16 %v205
    %v510 = vunpack.c.l.b16 %v206
    %v511 = vunpack.c.h.b16 %v206
    %v512 = vunpack.c.l.b16 %v207
    %v513 = vunpack.c.h.b16 %v207
    %v514 = vunpack.c.l.b16 %v208
    %v515 = vunpack.c.h.b16 %v208
    %v516 = vunpack.c.l.b16 %v209
    %v517 = vunpack.c.h.b16 %v209
    %v518 = vunpack.c.l.b16 %v210
    %v519 = vunpack.c.h.b16 %v210
    %v520 = vunpack.c.l.b16 %v211
    %v521 = vunpack.c.h.b16 %v211
    %v522 = vunpack.c.l.b16 %v212
    %v523 = vunpack.c.h.b16 %v212
    %v524 = vunpack.c.l.b16 %v213
    %v525 = vunpack.c.h.b16 %v213
    %v526 = vunpack.c.l.b16 %v214
    %v527 = vunpack.c.h.b16 %v214
    %v528 = vunpack.c.l.b16 %v215
    %v529 = vunpack.c.h.b16 %v215
    %v530 = vunpack.c.l.b16 %v216
    %v531 = vunpack.c.h.b16 %v216
    %v532 = vunpack.c.l.b16 %v217
    %v533 = vunpack.c.h.b16 %v217
    %v534 = vunpack.c.l.b16 %v218
    %v535 = vunpack.c.h.b16 %v218
    %v536 = vunpack.c.l.b16 %v219
    %v537 = vunpack.c.h.b16 %v219
    %v538 = vunpack.c.l.b16 %v220
    %v539 = vunpack.c.h.b16 %v220
    %v540 = vunpack.c.l.b16 %v221
    %v541 = vunpack.c.h.b16 %v221
    %v542 = vunpack.c.l.b16 %v222
    %v543 = vunpack.c.h.b16 %v222
    %v544 = vunpack.c.l.b16 %v223
    %v545 = vunpack.c.h.b16 %v223
    %v546 = vunpack.c.l.b16 %v224
    %v547 = vunpack.c.h.b16 %v224
    %v548 = vunpack.c.l.b16 %v225
    %v549 = vunpack.c.h.b16 %v225
    %v550 = vunpack.c.l.b16 %v226
    %v551 = vunpack.c.h.b16 %v226
    %v552 = vunpack.c.l.b16 %v227
    %v553 = vunpack.c.h.b16 %v227
    %v554 = vunpack.c.l.b16 %v228
    %v555 = vunpack.c.h.b16 %v228
    %v556 = vunpack.c.l.b16 %v229
    %v557 = vunpack.c.h.b16 %v229
    %v558 = vunpack.c.l.b16 %v230
    %v559 = vunpack.c.h.b16 %v230
    %v560 = vunpack.c.l.b16 %v231
    %v561 = vunpack.c.h.b16 %v231
    %v562 = vunpack.c.l.b16 %v232
    %v563 = vunpack.c.h.b16 %v232
    %v564 = vunpack.c.l.b16 %v233
    %v565 = vunpack.c.h.b16 %v233
    %v566 = vunpack.c.l.b16 %v234
    %v567 = vunpack.c.h.b16 %v234
    %v568 = vunpack.c.l.b16 %v235
    %v569 = vunpack.c.h.b16 %v235
    %v570 = vunpack.c.l.b16 %v236
    %v571 = vunpack.c.h.b16 %v236
    %v572 = vunpack.c.l.b16 %v237
    %v573 = vunpack.c.h.b16 %v237
    %v574 = vunpack.c.l.b16 %v238
    %v575 = vunpack.c.h.b16 %v238
    %v576 = vpack.c.b16 %v388, %v384
    %v577 = vpack.c.b16 %v389, %v385
    %v578 = vpack.c.b16 %v390, %v386
    %v579 = vpack.c.b16 %v391, %v387
    %v580 = vpack.c.b16 %v396, %v392
    %v581 = vpack.c.b16 %v397, %v393
    %v582 = vpack.c.b16 %v398, %v394
    %v583 = vpack.c.b16 %v399, %v395
    %v584 = vpack.c.b16 %v404, %v400
    %v585 = vpack.c.b16 %v405, %v401
    %v586 = vpack.c.b16 %v406, %v402
    %v587 = vpack.c.b16 %v407, %v403
    %v588 = vpack.c.b16 %v412, %v408
    %v589 = vpack.c.b16 %v413, %v409
    %v590 = vpack.c.b16 %v414, %v410
    %v591 = vpack.c.b16 %v415, %v411
    %v592 = vpack.c.b16 %v420, %v416
    %v593 = vpack.c.b16 %v421, %v417
    %v594 = vpack.c.b16 %v422, %v418
    %v595 = vpack.c.b16 %v423, %v419
    %v596 = vpack.c.b16 %v428, %v424
    %v597 = vpack.c.b16 %v429, %v425
    %v598 = vpack.c.b16 %v430, %v426
    %v599 = vpack.c.b16 %v431, %v427
    %v600 = vpack.c.b16 %v436, %v432
    %v601 = vpack.c.b16 %v437, %v433
    %v602 = vpack.c.b16 %v438, %v434
    %v603 = vpack.c.b16 %v439, %v435
    %v604 = vpack.c.b16 %v444, %v440
    %v605 = vpack.c.b16 %v445, %v441
    %v606 = vpack.c.b16 %v446, %v442
    %v607 = vpack.c.b16 %v447, %v443
    %v608 = vpack.c.b16 %v452, %v448
    %v609 = vpack.c.b16 %v453, %v449
    %v610 = vpack.c.b16 %v454, %v450
    %v611 = vpack.c.b16 %v455, %v451
    %v612 = vpack.c.b16 %v460, %v456
    %v613 = vpack.c.b16 %v461, %v457
    %v614 = vpack.c.b16 %v462, %v458
    %v615 = vpack.c.b16 %v463, %v459
    %v616 = vpack.c.b16 %v468, %v464
    %v617 = vpack.c.b16 %v469, %v465
    %v618 = vpack.c.b16 %v470, %v466
    %v619 = vpack.c.b16 %v471, %v467
    %v620 = vpack.c.b16 %v476, %v472
    %v621 = vpack.c.b16 %v477, %v473
    %v622 = vpack.c.b16 %v478, %v474
    %v623 = vpack.c.b16 %v479, %v475
    %v624 = vpack.c.b16 %v484, %v480
    %v625 = vpack.c.b16 %v485, %v481
    %v626 = vpack.c.b16 %v486, %v482
    %v627 = vpack.c.b16 %v487, %v483
    %v628 = vpack.c.b16 %v492, %v488
    %v629 = vpack.c.b16 %v493, %v489
    %v630 = vpack.c.b16 %v494, %v490
    %v631 = vpack.c.b16 %v495, %v491
    %v632 = vpack.c.b16 %v500, %v496
    %v633 = vpack.c.b16 %v501, %v497
    %v634 = vpack.c.b16 %v502, %v498
    %v635 = vpack.c.b16 %v503, %v499
    %v636 = vpack.c.b16 %v508, %v504
    %v637 = vpack.c.b16 %v509, %v505
    %v638 = vpack.c.b16 %v510, %v506
    %v639 = vpack.c.b16 %v511, %v507
    %v640 = vpack.c.b16 %v516, %v512
    %v641 = vpack.c.b16 %v517, %v513
    %v642 = vpack.c.b16 %v518, %v514
    %v643 = vpack.c.b16 %v519, %v515
    %v644 = vpack.c.b16 %v524, %v520
    %v645 = vpack.c.b16 %v525, %v521
    %v646 = vpack.c.b16 %v526, %v522
    %v647 = vpack.c.b16 %v527, %v523
    %v648 = vpack.c.b16 %v532, %v528
    %v649 = vpack.c.b16 %v533, %v529
    %v650 = vpack.c.b16 %v534, %v530
    %v651 = vpack.c.b16 %v535, %v531
    %v652 = vpack.c.b16 %v540, %v536
    %v653 = vpack.c.b16 %v541, %v537
    %v654 = vpack.c.b16 %v542, %v538
    %v655 = vpack.c.b16 %v543, %v539
    %v656 = vpack.c.b16 %v548, %v544
    %v657 = vpack.c.b16 %v549, %v545
    %v658 = vpack.c.b16 %v550, %v546
    %v659 = vpack.c.b16 %v551, %v547
    %v660 = vpack.c.b16 %v556, %v552
    %v661 = vpack.c.b16 %v557, %v553
    %v662 = vpack.c.b16 %v558, %v554
    %v663 = vpack.c.b16 %v559, %v555
    %v664 = vpack.c.b16 %v564, %v560
    %v665 = vpack.c.b16 %v565, %v561
    %v666 = vpack.c.b16 %v566, %v562
    %v667 = vpack.c.b16 %v567, %v563
    %v668 = vpack.c.b16 %v572, %v568
    %v669 = vpack.c.b16 %v573, %v569
    %v670 = vpack.c.b16 %v574, %v570
    %v671 = vpack.c.b16 %v575, %v571
    %768 = vmatprep.subr.bf16.mxu0 %v577
    %769 = vmatpush1.bf16.msra.mxu0 %v576
    %770 = vmatprep.subr.bf16.mxu0 %v581
    %771 = vmatpush1.bf16.msra.mxu0 %v580
    %772 = vmatprep.subr.bf16.mxu0 %v585
    %773 = vmatpush1.bf16.msra.mxu0 %v584
    %774 = vmatprep.subr.bf16.mxu0 %v589
    %775 = vmatpush1.bf16.msra.mxu0 %v588
    %776 = vmatprep.subr.bf16.mxu0 %v593
    %777 = vmatpush1.bf16.msra.mxu0 %v592
    %778 = vmatprep.subr.bf16.mxu0 %v597
    %779 = vmatpush1.bf16.msra.mxu0 %v596
    %780 = vmatprep.subr.bf16.mxu0 %v601
    %781 = vmatpush1.bf16.msra.mxu0 %v600
    %782 = vmatprep.subr.bf16.mxu0 %v605
    %783 = vmatpush1.bf16.msra.mxu0 %v604
    %784 = vmatprep.subr.bf16.mxu0 %v609
    %785 = vmatpush1.bf16.msra.mxu0 %v608
    %786 = vmatprep.subr.bf16.mxu0 %v613
    %787 = vmatpush1.bf16.msra.mxu0 %v612
    %788 = vmatprep.subr.bf16.mxu0 %v617
    %789 = vmatpush1.bf16.msra.mxu0 %v616
    %790 = vmatprep.subr.bf16.mxu0 %v621
    %791 = vmatpush1.bf16.msra.mxu0 %v620
    %792 = vmatprep.subr.bf16.mxu0 %v625
    %793 = vmatpush1.bf16.msra.mxu0 %v624
    %794 = vmatprep.subr.bf16.mxu0 %v629
    %795 = vmatpush1.bf16.msra.mxu0 %v628
    %796 = vmatprep.subr.bf16.mxu0 %v633
    %797 = vmatpush1.bf16.msra.mxu0 %v632
    %798 = vmatprep.subr.bf16.mxu0 %v637
    %799 = vmatpush1.bf16.msra.mxu0 %v636
    %800 = vmatprep.mubr.bf16.mxu0 %v283
    %801 = vmatmul.mubr.bf16.gmra.mrb[0].mxu0 %v276
    %v802 = vpop.f32.mrb[0].mxu0
    %v803 = vadd.f32 %v244, %v802
    %v804 = vpop.f32.mrb[0].mxu0
    %v805 = vadd.f32 %v248, %v804
    %v806 = vpop.f32.mrb[0].mxu0
    %v807 = vpop.f32.mrb[0].mxu0
    %808 = vdwg.mxu0
    %809 = vmatprep.subr.bf16.mxu0 %v641
    %810 = vmatpush1.bf16.msra.mxu0 %v640
    %811 = vmatprep.subr.bf16.mxu0 %v645
    %812 = vmatpush1.bf16.msra.mxu0 %v644
    %813 = vmatprep.subr.bf16.mxu0 %v649
    %814 = vmatpush1.bf16.msra.mxu0 %v648
    %815 = vmatprep.subr.bf16.mxu0 %v653
    %816 = vmatpush1.bf16.msra.mxu0 %v652
    %817 = vmatprep.subr.bf16.mxu0 %v657
    %818 = vmatpush1.bf16.msra.mxu0 %v656
    %819 = vmatprep.subr.bf16.mxu0 %v661
    %820 = vmatpush1.bf16.msra.mxu0 %v660
    %821 = vmatprep.subr.bf16.mxu0 %v665
    %822 = vmatpush1.bf16.msra.mxu0 %v664
    %823 = vmatprep.subr.bf16.mxu0 %v669
    %824 = vmatpush1.bf16.msra.mxu0 %v668
    %825 = vmatprep.subr.bf16.mxu0 0
    %826 = vmatpush1.bf16.msra.mxu0 0
    %827 = vmatprep.subr.bf16.mxu0 0
    %828 = vmatpush1.bf16.msra.mxu0 0
    %829 = vmatprep.subr.bf16.mxu0 0
    %830 = vmatpush1.bf16.msra.mxu0 0
    %831 = vmatprep.subr.bf16.mxu0 0
    %832 = vmatpush1.bf16.msra.mxu0 0
    %833 = vmatprep.subr.bf16.mxu0 0
    %834 = vmatpush1.bf16.msra.mxu0 0
    %835 = vmatprep.subr.bf16.mxu0 0
    %836 = vmatpush1.bf16.msra.mxu0 0
    %837 = vmatprep.subr.bf16.mxu0 0
    %838 = vmatpush1.bf16.msra.mxu0 0
    %839 = vmatprep.subr.bf16.mxu0 0
    %840 = vmatpush1.bf16.msra.mxu0 0
    %841 = vmatprep.mubr.bf16.mxu0 0
    %842 = vmatmul.mubr.bf16.gmra.mrb[0].mxu0 %v284
    %v843 = vpop.f32.mrb[0].mxu0
    %v844 = vadd.f32 %v803, %v843
    %v845 = vpop.f32.mrb[0].mxu0
    %v846 = vadd.f32 %v805, %v845
    %v847 = vpop.f32.mrb[0].mxu0
    %v848 = vpop.f32.mrb[0].mxu0
    %849 = vdwg.mxu0
    %850 = vmatprep.subr.bf16.mxu0 %v579
    %851 = vmatpush1.bf16.msra.mxu0 %v578
    %852 = vmatprep.subr.bf16.mxu0 %v583
    %853 = vmatpush1.bf16.msra.mxu0 %v582
    %854 = vmatprep.subr.bf16.mxu0 %v587
    %855 = vmatpush1.bf16.msra.mxu0 %v586
    %856 = vmatprep.subr.bf16.mxu0 %v591
    %857 = vmatpush1.bf16.msra.mxu0 %v590
    %858 = vmatprep.subr.bf16.mxu0 %v595
    %859 = vmatpush1.bf16.msra.mxu0 %v594
    %860 = vmatprep.subr.bf16.mxu0 %v599
    %861 = vmatpush1.bf16.msra.mxu0 %v598
    %862 = vmatprep.subr.bf16.mxu0 %v603
    %863 = vmatpush1.bf16.msra.mxu0 %v602
    %864 = vmatprep.subr.bf16.mxu0 %v607
    %865 = vmatpush1.bf16.msra.mxu0 %v606
    %866 = vmatprep.subr.bf16.mxu0 %v611
    %867 = vmatpush1.bf16.msra.mxu0 %v610
    %868 = vmatprep.subr.bf16.mxu0 %v615
    %869 = vmatpush1.bf16.msra.mxu0 %v614
    %870 = vmatprep.subr.bf16.mxu0 %v619
    %871 = vmatpush1.bf16.msra.mxu0 %v618
    %872 = vmatprep.subr.bf16.mxu0 %v623
    %873 = vmatpush1.bf16.msra.mxu0 %v622
    %874 = vmatprep.subr.bf16.mxu0 %v627
    %875 = vmatpush1.bf16.msra.mxu0 %v626
    %876 = vmatprep.subr.bf16.mxu0 %v631
    %877 = vmatpush1.bf16.msra.mxu0 %v630
    %878 = vmatprep.subr.bf16.mxu0 %v635
    %879 = vmatpush1.bf16.msra.mxu0 %v634
    %880 = vmatprep.subr.bf16.mxu0 %v639
    %881 = vmatpush1.bf16.msra.mxu0 %v638
    %882 = vmatprep.mubr.bf16.mxu0 %v283
    %883 = vmatmul.mubr.bf16.gmra.mrb[0].mxu0 %v276
    %v884 = vpop.f32.mrb[0].mxu0
    %v885 = vadd.f32 %v252, %v884
    %v886 = vpop.f32.mrb[0].mxu0
    %v887 = vadd.f32 %v256, %v886
    %v888 = vpop.f32.mrb[0].mxu0
    %v889 = vpop.f32.mrb[0].mxu0
    %890 = vdwg.mxu0
    %891 = vmatprep.subr.bf16.mxu0 %v643
    %892 = vmatpush1.bf16.msra.mxu0 %v642
    %893 = vmatprep.subr.bf16.mxu0 %v647
    %894 = vmatpush1.bf16.msra.mxu0 %v646
    %895 = vmatprep.subr.bf16.mxu0 %v651
    %896 = vmatpush1.bf16.msra.mxu0 %v650
    %897 = vmatprep.subr.bf16.mxu0 %v655
    %898 = vmatpush1.bf16.msra.mxu0 %v654
    %899 = vmatprep.subr.bf16.mxu0 %v659
    %900 = vmatpush1.bf16.msra.mxu0 %v658
    %901 = vmatprep.subr.bf16.mxu0 %v663
    %902 = vmatpush1.bf16.msra.mxu0 %v662
    %903 = vmatprep.subr.bf16.mxu0 %v667
    %904 = vmatpush1.bf16.msra.mxu0 %v666
    %905 = vmatprep.subr.bf16.mxu0 %v671
    %906 = vmatpush1.bf16.msra.mxu0 %v670
    %907 = vmatprep.subr.bf16.mxu0 0
    %908 = vmatpush1.bf16.msra.mxu0 0
    %909 = vmatprep.subr.bf16.mxu0 0
    %910 = vmatpush1.bf16.msra.mxu0 0
    %911 = vmatprep.subr.bf16.mxu0 0
    %912 = vmatpush1.bf16.msra.mxu0 0
    %913 = vmatprep.subr.bf16.mxu0 0
    %914 = vmatpush1.bf16.msra.mxu0 0
    %915 = vmatprep.subr.bf16.mxu0 0
    %916 = vmatpush1.bf16.msra.mxu0 0
    %917 = vmatprep.subr.bf16.mxu0 0
    %918 = vmatpush1.bf16.msra.mxu0 0
    %919 = vmatprep.subr.bf16.mxu0 0
    %920 = vmatpush1.bf16.msra.mxu0 0
    %921 = vmatprep.subr.bf16.mxu0 0
    %922 = vmatpush1.bf16.msra.mxu0 0
    %923 = vmatprep.mubr.bf16.mxu0 0
    %924 = vmatmul.mubr.bf16.gmra.mrb[0].mxu0 %v284
    %v925 = vpop.f32.mrb[0].mxu0
    %v926 = vadd.f32 %v885, %v925
    %v927 = vpop.f32.mrb[0].mxu0
    %v928 = vadd.f32 %v887, %v927
    %v929 = vpop.f32.mrb[0].mxu0
    %v930 = vpop.f32.mrb[0].mxu0
    %931 = vdwg.mxu0
    %vm932 = vcmp.gt.f32.partialorder %v844, 0.0
    %vm933 = vcmp.gt.f32.partialorder %v846, 0.0
    %vm934 = vcmp.gt.f32.partialorder %v926, 0.0
    %vm935 = vcmp.gt.f32.partialorder %v928, 0.0
    %v936 = vmin.f32 %v844, 0.0
    %v937 = vmin.f32 %v846, 0.0
    %v938 = vmin.f32 %v926, 0.0
    %v939 = vmin.f32 %v928, 0.0
    %v940 = vmul.f32 %v936, 1.442695
    %v941 = vpow.pop %v940
    %v942 = vmul.f32 %v937, 1.442695
    %v943 = vpow.pop %v942
    %v944 = vmul.f32 %v938, 1.442695
    %v945 = vpow.pop %v944
    %v946 = vmul.f32 %v939, 1.442695
    %v947 = vpow.pop %v946
    %v948 = vsub.f32 %v941, 1.0
    %v949 = vsub.f32 %v943, 1.0
    %v950 = vsub.f32 %v945, 1.0
    %v951 = vsub.f32 %v947, 1.0
    %v952 = vsel %vm932, %v844, %v948
    %v953 = vsel %vm933, %v846, %v949
    %v954 = vsel %vm934, %v926, %v950
    %v955 = vsel %vm935, %v928, %v951
    %v956 = vpack.c.bf16 %v952, %v952
    %v957 = vpack.c.bf16 %v953, %v953
    %v958 = vpack.c.bf16 %v954, %v954
    %v959 = vpack.c.bf16 %v955, %v955
    %v960 = vld [vmem:[#allocation7] sm:$0xf]
    %v961 = vld [vmem:[#allocation7 + $0x4] sm:$0xf]
    %v962 = vld [vmem:[#allocation7 + $0x8] sm:$0xf]
    %v963 = vld [vmem:[#allocation7 + $0xc] sm:$0xf]
    %v964 = vld [vmem:[#allocation7 + $0x10] sm:$0xf]
    %v965 = vld [vmem:[#allocation7 + $0x14] sm:$0xf]
    %v966 = vld [vmem:[#allocation7 + $0x18] sm:$0xf]
    %v967 = vld [vmem:[#allocation7 + $0x1c] sm:$0xf]
    %v968 = vld [vmem:[#allocation7 + $0x20] sm:$0xf]
    %v969 = vld [vmem:[#allocation7 + $0x24] sm:$0xf]
    %v970 = vld [vmem:[#allocation7 + $0x28] sm:$0xf]
    %v971 = vld [vmem:[#allocation7 + $0x2c] sm:$0xf]
    %v972 = vld [vmem:[#allocation7 + $0x30] sm:$0xf]
    %v973 = vld [vmem:[#allocation7 + $0x34] sm:$0xf]
    %v974 = vld [vmem:[#allocation7 + $0x38] sm:$0xf]
    %v975 = vld [vmem:[#allocation7 + $0x3c] sm:$0xf]
    %v976 = vld [vmem:[#allocation7 + $0x40] sm:$0xf]
    %v977 = vld [vmem:[#allocation7 + $0x44] sm:$0xf]
    %v978 = vld [vmem:[#allocation7 + $0x48] sm:$0xf]
    %v979 = vld [vmem:[#allocation7 + $0x4c] sm:$0xf]
    %v980 = vld [vmem:[#allocation7 + $0x50] sm:$0xf]
    %v981 = vld [vmem:[#allocation7 + $0x54] sm:$0xf]
    %v982 = vld [vmem:[#allocation7 + $0x58] sm:$0xf]
    %v983 = vld [vmem:[#allocation7 + $0x5c] sm:$0xf]
    %v984 = vld [vmem:[#allocation7 + $0x60] sm:$0xf]
    %v985 = vld [vmem:[#allocation7 + $0x64] sm:$0xf]
    %v986 = vld [vmem:[#allocation7 + $0x68] sm:$0xf]
    %v987 = vld [vmem:[#allocation7 + $0x6c] sm:$0xf]
    %v988 = vld [vmem:[#allocation7 + $0x70] sm:$0xf]
    %v989 = vld [vmem:[#allocation7 + $0x74] sm:$0xf]
    %v990 = vld [vmem:[#allocation7 + $0x78] sm:$0xf]
    %v991 = vld [vmem:[#allocation7 + $0x7c] sm:$0xf]
    %v992 = vld [vmem:[#allocation7 + $0x80] sm:$0xf]
    %v993 = vld [vmem:[#allocation7 + $0x84] sm:$0xf]
    %v994 = vld [vmem:[#allocation7 + $0x88] sm:$0xf]
    %v995 = vld [vmem:[#allocation7 + $0x8c] sm:$0xf]
    %v996 = vld [vmem:[#allocation7 + $0x90] sm:$0xf]
    %v997 = vld [vmem:[#allocation7 + $0x94] sm:$0xf]
    %v998 = vld [vmem:[#allocation7 + $0x98] sm:$0xf]
    %v999 = vld [vmem:[#allocation7 + $0x9c] sm:$0xf]
    %v1000 = vld [vmem:[#allocation7 + $0xa0] sm:$0xf]
    %v1001 = vld [vmem:[#allocation7 + $0xa4] sm:$0xf]
    %v1002 = vld [vmem:[#allocation7 + $0xa8] sm:$0xf]
    %v1003 = vld [vmem:[#allocation7 + $0xac] sm:$0xf]
    %v1004 = vld [vmem:[#allocation7 + $0xb0] sm:$0xf]
    %v1005 = vld [vmem:[#allocation7 + $0xb4] sm:$0xf]
    %v1006 = vld [vmem:[#allocation7 + $0xb8] sm:$0xf]
    %v1007 = vld [vmem:[#allocation7 + $0xbc] sm:$0xf]
    %v1008 = vld [vmem:[#allocation7 + $0xc0] sm:$0xf]
    %v1009 = vld [vmem:[#allocation7 + $0xc4] sm:$0xf]
    %v1010 = vld [vmem:[#allocation7 + $0xc8] sm:$0xf]
    %v1011 = vld [vmem:[#allocation7 + $0xcc] sm:$0xf]
    %v1012 = vld [vmem:[#allocation7 + $0xd0] sm:$0xf]
    %v1013 = vld [vmem:[#allocation7 + $0xd4] sm:$0xf]
    %v1014 = vld [vmem:[#allocation7 + $0xd8] sm:$0xf]
    %v1015 = vld [vmem:[#allocation7 + $0xdc] sm:$0xf]
    %v1016 = vld [vmem:[#allocation7 + $0xe0] sm:$0xf]
    %v1017 = vld [vmem:[#allocation7 + $0xe4] sm:$0xf]
    %v1018 = vld [vmem:[#allocation7 + $0xe8] sm:$0xf]
    %v1019 = vld [vmem:[#allocation7 + $0xec] sm:$0xf]
    %v1020 = vld [vmem:[#allocation7 + $0xf0] sm:$0xf]
    %v1021 = vld [vmem:[#allocation7 + $0xf4] sm:$0xf]
    %v1022 = vld [vmem:[#allocation7 + $0xf8] sm:$0xf]
    %v1023 = vld [vmem:[#allocation7 + $0xfc] sm:$0xf]
    %v1024 = vld [vmem:[#allocation8] sm:$0x1]
    %v1026 = vlaneseq
    %v1027 = vshrl.u32 %v1026, 7
    %v1028 = vsub.s32 0, %v1027
    %v1029 = vrot.slane %v1024, %v1028
    %v1095 = vunpack.c.l.b16 %v960
    %v1096 = vunpack.c.l.b16 %v961
    %v1097 = vunpack.c.l.b16 %v962
    %v1098 = vunpack.c.l.b16 %v963
    %v1099 = vunpack.c.l.b16 %v964
    %v1100 = vunpack.c.l.b16 %v965
    %v1101 = vunpack.c.l.b16 %v966
    %v1102 = vunpack.c.l.b16 %v967
    %v1103 = vunpack.c.l.b16 %v968
    %v1104 = vunpack.c.l.b16 %v969
    %v1105 = vunpack.c.l.b16 %v970
    %v1106 = vunpack.c.l.b16 %v971
    %v1107 = vunpack.c.l.b16 %v972
    %v1108 = vunpack.c.l.b16 %v973
    %v1109 = vunpack.c.l.b16 %v974
    %v1110 = vunpack.c.l.b16 %v975
    %v1111 = vunpack.c.l.b16 %v976
    %v1112 = vunpack.c.l.b16 %v977
    %v1113 = vunpack.c.l.b16 %v978
    %v1114 = vunpack.c.l.b16 %v979
    %v1115 = vunpack.c.l.b16 %v980
    %v1116 = vunpack.c.l.b16 %v981
    %v1117 = vunpack.c.l.b16 %v982
    %v1118 = vunpack.c.l.b16 %v983
    %v1119 = vunpack.c.l.b16 %v984
    %v1120 = vunpack.c.l.b16 %v985
    %v1121 = vunpack.c.l.b16 %v986
    %v1122 = vunpack.c.l.b16 %v987
    %v1123 = vunpack.c.l.b16 %v988
    %v1124 = vunpack.c.l.b16 %v989
    %v1125 = vunpack.c.l.b16 %v990
    %v1126 = vunpack.c.l.b16 %v991
    %v1127 = vunpack.c.l.b16 %v992
    %v1128 = vunpack.c.l.b16 %v993
    %v1129 = vunpack.c.l.b16 %v994
    %v1130 = vunpack.c.l.b16 %v995
    %v1131 = vunpack.c.l.b16 %v996
    %v1132 = vunpack.c.l.b16 %v997
    %v1133 = vunpack.c.l.b16 %v998
    %v1134 = vunpack.c.l.b16 %v999
    %v1135 = vunpack.c.l.b16 %v1000
    %v1136 = vunpack.c.l.b16 %v1001
    %v1137 = vunpack.c.l.b16 %v1002
    %v1138 = vunpack.c.l.b16 %v1003
    %v1139 = vunpack.c.l.b16 %v1004
    %v1140 = vunpack.c.l.b16 %v1005
    %v1141 = vunpack.c.l.b16 %v1006
    %v1142 = vunpack.c.l.b16 %v1007
    %v1143 = vunpack.c.l.b16 %v1008
    %v1144 = vunpack.c.l.b16 %v1009
    %v1145 = vunpack.c.l.b16 %v1010
    %v1146 = vunpack.c.l.b16 %v1011
    %v1147 = vunpack.c.l.b16 %v1012
    %v1148 = vunpack.c.l.b16 %v1013
    %v1149 = vunpack.c.l.b16 %v1014
    %v1150 = vunpack.c.l.b16 %v1015
    %v1151 = vunpack.c.l.b16 %v1016
    %v1152 = vunpack.c.l.b16 %v1017
    %v1153 = vunpack.c.l.b16 %v1018
    %v1154 = vunpack.c.l.b16 %v1019
    %v1155 = vunpack.c.l.b16 %v1020
    %v1156 = vunpack.c.l.b16 %v1021
    %v1157 = vunpack.c.l.b16 %v1022
    %v1158 = vunpack.c.l.b16 %v1023
    %v1159 = vpack.c.b16 %v1096, %v1095
    %v1160 = vpack.c.b16 %v1098, %v1097
    %v1161 = vpack.c.b16 %v1100, %v1099
    %v1162 = vpack.c.b16 %v1102, %v1101
    %v1163 = vpack.c.b16 %v1104, %v1103
    %v1164 = vpack.c.b16 %v1106, %v1105
    %v1165 = vpack.c.b16 %v1108, %v1107
    %v1166 = vpack.c.b16 %v1110, %v1109
    %v1167 = vpack.c.b16 %v1112, %v1111
    %v1168 = vpack.c.b16 %v1114, %v1113
    %v1169 = vpack.c.b16 %v1116, %v1115
    %v1170 = vpack.c.b16 %v1118, %v1117
    %v1171 = vpack.c.b16 %v1120, %v1119
    %v1172 = vpack.c.b16 %v1122, %v1121
    %v1173 = vpack.c.b16 %v1124, %v1123
    %v1174 = vpack.c.b16 %v1126, %v1125
    %v1175 = vpack.c.b16 %v1128, %v1127
    %v1176 = vpack.c.b16 %v1130, %v1129
    %v1177 = vpack.c.b16 %v1132, %v1131
    %v1178 = vpack.c.b16 %v1134, %v1133
    %v1179 = vpack.c.b16 %v1136, %v1135
    %v1180 = vpack.c.b16 %v1138, %v1137
    %v1181 = vpack.c.b16 %v1140, %v1139
    %v1182 = vpack.c.b16 %v1142, %v1141
    %v1183 = vpack.c.b16 %v1144, %v1143
    %v1184 = vpack.c.b16 %v1146, %v1145
    %v1185 = vpack.c.b16 %v1148, %v1147
    %v1186 = vpack.c.b16 %v1150, %v1149
    %v1187 = vpack.c.b16 %v1152, %v1151
    %v1188 = vpack.c.b16 %v1154, %v1153
    %v1189 = vpack.c.b16 %v1156, %v1155
    %v1190 = vpack.c.b16 %v1158, %v1157
    %1223 = vmatprep.subr.bf16.mxu0 0
    %1224 = vmatpush1.bf16.msra.mxu0 %v1159
    %1225 = vmatprep.subr.bf16.mxu0 0
    %1226 = vmatpush1.bf16.msra.mxu0 %v1160
    %1227 = vmatprep.subr.bf16.mxu0 0
    %1228 = vmatpush1.bf16.msra.mxu0 %v1161
    %1229 = vmatprep.subr.bf16.mxu0 0
    %1230 = vmatpush1.bf16.msra.mxu0 %v1162
    %1231 = vmatprep.subr.bf16.mxu0 0
    %1232 = vmatpush1.bf16.msra.mxu0 %v1163
    %1233 = vmatprep.subr.bf16.mxu0 0
    %1234 = vmatpush1.bf16.msra.mxu0 %v1164
    %1235 = vmatprep.subr.bf16.mxu0 0
    %1236 = vmatpush1.bf16.msra.mxu0 %v1165
    %1237 = vmatprep.subr.bf16.mxu0 0
    %1238 = vmatpush1.bf16.msra.mxu0 %v1166
    %1239 = vmatprep.subr.bf16.mxu0 0
    %1240 = vmatpush1.bf16.msra.mxu0 %v1167
    %1241 = vmatprep.subr.bf16.mxu0 0
    %1242 = vmatpush1.bf16.msra.mxu0 %v1168
    %1243 = vmatprep.subr.bf16.mxu0 0
    %1244 = vmatpush1.bf16.msra.mxu0 %v1169
    %1245 = vmatprep.subr.bf16.mxu0 0
    %1246 = vmatpush1.bf16.msra.mxu0 %v1170
    %1247 = vmatprep.subr.bf16.mxu0 0
    %1248 = vmatpush1.bf16.msra.mxu0 %v1171
    %1249 = vmatprep.subr.bf16.mxu0 0
    %1250 = vmatpush1.bf16.msra.mxu0 %v1172
    %1251 = vmatprep.subr.bf16.mxu0 0
    %1252 = vmatpush1.bf16.msra.mxu0 %v1173
    %1253 = vmatprep.subr.bf16.mxu0 0
    %1254 = vmatpush1.bf16.msra.mxu0 %v1174
    %1255 = vmatprep.mubr.bf16.mxu0 %v957
    %1256 = vmatmul.mubr.bf16.gmra.mrb[0].mxu0 %v956
    %v1257 = vpop.f32.mrb[0].mxu0
    %v1258 = vadd.f32 %v1029, %v1257
    %v1259 = vpop.f32.mrb[0].mxu0
    %v1260 = vpop.f32.mrb[0].mxu0
    %v1261 = vpop.f32.mrb[0].mxu0
    %1262 = vdwg.mxu0
    %1263 = vmatprep.subr.bf16.mxu0 0
    %1264 = vmatpush1.bf16.msra.mxu0 %v1175
    %1265 = vmatprep.subr.bf16.mxu0 0
    %1266 = vmatpush1.bf16.msra.mxu0 %v1176
    %1267 = vmatprep.subr.bf16.mxu0 0
    %1268 = vmatpush1.bf16.msra.mxu0 %v1177
    %1269 = vmatprep.subr.bf16.mxu0 0
    %1270 = vmatpush1.bf16.msra.mxu0 %v1178
    %1271 = vmatprep.subr.bf16.mxu0 0
    %1272 = vmatpush1.bf16.msra.mxu0 %v1179
    %1273 = vmatprep.subr.bf16.mxu0 0
    %1274 = vmatpush1.bf16.msra.mxu0 %v1180
    %1275 = vmatprep.subr.bf16.mxu0 0
    %1276 = vmatpush1.bf16.msra.mxu0 %v1181
    %1277 = vmatprep.subr.bf16.mxu0 0
    %1278 = vmatpush1.bf16.msra.mxu0 %v1182
    %1279 = vmatprep.subr.bf16.mxu0 0
    %1280 = vmatpush1.bf16.msra.mxu0 %v1183
    %1281 = vmatprep.subr.bf16.mxu0 0
    %1282 = vmatpush1.bf16.msra.mxu0 %v1184
    %1283 = vmatprep.subr.bf16.mxu0 0
    %1284 = vmatpush1.bf16.msra.mxu0 %v1185
    %1285 = vmatprep.subr.bf16.mxu0 0
    %1286 = vmatpush1.bf16.msra.mxu0 %v1186
    %1287 = vmatprep.subr.bf16.mxu0 0
    %1288 = vmatpush1.bf16.msra.mxu0 %v1187
    %1289 = vmatprep.subr.bf16.mxu0 0
    %1290 = vmatpush1.bf16.msra.mxu0 %v1188
    %1291 = vmatprep.subr.bf16.mxu0 0
    %1292 = vmatpush1.bf16.msra.mxu0 %v1189
    %1293 = vmatprep.subr.bf16.mxu0 0
    %1294 = vmatpush1.bf16.msra.mxu0 %v1190
    %1295 = vmatprep.mubr.bf16.mxu0 %v959
    %1296 = vmatmul.mubr.bf16.gmra.mrb[0].mxu0 %v958
    %v1297 = vpop.f32.mrb[0].mxu0
    %v1298 = vadd.f32 %v1258, %v1297
    %v1299 = vpop.f32.mrb[0].mxu0
    %v1300 = vpop.f32.mrb[0].mxu0
    %v1301 = vpop.f32.mrb[0].mxu0
    %1302 = vdwg.mxu0
    %vm1303 = vcmp.gt.f32.partialorder %v1298, 0.0
    %v1304 = vmin.f32 %v1298, 0.0
    %v1305 = vmul.f32 %v1304, 1.442695
    %v1306 = vpow.pop %v1305
    %v1307 = vsub.f32 %v1306, 1.0
    %v1308 = vsel %vm1303, %v1298, %v1307
    %v1309 = vpack.c.bf16 %v1308, %v1308
    %v1310 = vld [vmem:[%s6] sm:$0xf]
    %v1311 = vld [vmem:[%s6 + $0x4] sm:$0xf]
    %v1312 = vld [vmem:[%s6 + $0x8] sm:$0xf]
    %v1313 = vld [vmem:[%s6 + $0xc] sm:$0xf]
    %v1314 = vld [vmem:[%s6 + $0x10] sm:$0xf]
    %v1315 = vld [vmem:[%s6 + $0x14] sm:$0xf]
    %v1316 = vld [vmem:[%s6 + $0x18] sm:$0xf]
    %v1317 = vld [vmem:[%s6 + $0x1c] sm:$0xf]
    %v1318 = vld [vmem:[%s6 + $0x20] sm:$0xf]
    %v1319 = vld [vmem:[%s6 + $0x24] sm:$0xf]
    %v1320 = vld [vmem:[%s6 + $0x28] sm:$0xf]
    %v1321 = vld [vmem:[%s6 + $0x2c] sm:$0xf]
    %v1322 = vld [vmem:[%s6 + $0x30] sm:$0xf]
    %v1323 = vld [vmem:[%s6 + $0x34] sm:$0xf]
    %v1324 = vld [vmem:[%s6 + $0x38] sm:$0xf]
    %v1325 = vld [vmem:[%s6 + $0x3c] sm:$0xf]
    %v1326 = vld [vmem:[#allocation10] sm:$0x1]
    %v1328 = vlaneseq
    %v1329 = vshrl.u32 %v1328, 7
    %v1330 = vsub.s32 0, %v1329
    %v1331 = vrot.slane %v1326, %v1330
    %v1349 = vunpack.c.l.b16 %v1310
    %v1350 = vunpack.c.l.b16 %v1311
    %v1351 = vunpack.c.l.b16 %v1312
    %v1352 = vunpack.c.l.b16 %v1313
    %v1353 = vunpack.c.l.b16 %v1314
    %v1354 = vunpack.c.l.b16 %v1315
    %v1355 = vunpack.c.l.b16 %v1316
    %v1356 = vunpack.c.l.b16 %v1317
    %v1357 = vunpack.c.l.b16 %v1318
    %v1358 = vunpack.c.l.b16 %v1319
    %v1359 = vunpack.c.l.b16 %v1320
    %v1360 = vunpack.c.l.b16 %v1321
    %v1361 = vunpack.c.l.b16 %v1322
    %v1362 = vunpack.c.l.b16 %v1323
    %v1363 = vunpack.c.l.b16 %v1324
    %v1364 = vunpack.c.l.b16 %v1325
    %v1365 = vpack.c.b16 %v1350, %v1349
    %v1366 = vpack.c.b16 %v1352, %v1351
    %v1367 = vpack.c.b16 %v1354, %v1353
    %v1368 = vpack.c.b16 %v1356, %v1355
    %v1369 = vpack.c.b16 %v1358, %v1357
    %v1370 = vpack.c.b16 %v1360, %v1359
    %v1371 = vpack.c.b16 %v1362, %v1361
    %v1372 = vpack.c.b16 %v1364, %v1363
    %1381 = vmatprep.subr.bf16.mxu0 0
    %1382 = vmatpush1.bf16.msra.mxu0 %v1365
    %1383 = vmatprep.subr.bf16.mxu0 0
    %1384 = vmatpush1.bf16.msra.mxu0 %v1366
    %1385 = vmatprep.subr.bf16.mxu0 0
    %1386 = vmatpush1.bf16.msra.mxu0 %v1367
    %1387 = vmatprep.subr.bf16.mxu0 0
    %1388 = vmatpush1.bf16.msra.mxu0 %v1368
    %1389 = vmatprep.subr.bf16.mxu0 0
    %1390 = vmatpush1.bf16.msra.mxu0 %v1369
    %1391 = vmatprep.subr.bf16.mxu0 0
    %1392 = vmatpush1.bf16.msra.mxu0 %v1370
    %1393 = vmatprep.subr.bf16.mxu0 0
    %1394 = vmatpush1.bf16.msra.mxu0 %v1371
    %1395 = vmatprep.subr.bf16.mxu0 0
    %1396 = vmatpush1.bf16.msra.mxu0 %v1372
    %1397 = vmatprep.subr.bf16.mxu0 0
    %1398 = vmatpush1.bf16.msra.mxu0 0
    %1399 = vmatprep.subr.bf16.mxu0 0
    %1400 = vmatpush1.bf16.msra.mxu0 0
    %1401 = vmatprep.subr.bf16.mxu0 0
    %1402 = vmatpush1.bf16.msra.mxu0 0
    %1403 = vmatprep.subr.bf16.mxu0 0
    %1404 = vmatpush1.bf16.msra.mxu0 0
    %1405 = vmatprep.subr.bf16.mxu0 0
    %1406 = vmatpush1.bf16.msra.mxu0 0
    %1407 = vmatprep.subr.bf16.mxu0 0
    %1408 = vmatpush1.bf16.msra.mxu0 0
    %1409 = vmatprep.subr.bf16.mxu0 0
    %1410 = vmatpush1.bf16.msra.mxu0 0
    %1411 = vmatprep.subr.bf16.mxu0 0
    %1412 = vmatpush1.bf16.msra.mxu0 0
    %1413 = vmatprep.mubr.bf16.mxu0 0
    %1414 = vmatmul.mubr.bf16.gmra.mrb[0].mxu0 %v1309
    %v1415 = vpop.f32.mrb[0].mxu0
    %v1416 = vadd.f32 %v1331, %v1415
    %v1417 = vpop.f32.mrb[0].mxu0
    %v1418 = vpop.f32.mrb[0].mxu0
    %v1419 = vpop.f32.mrb[0].mxu0
    %1420 = vdwg.mxu0
    %v1421 = vmax.f32 %v1416, 0.0
    %v1422 = vpack.c.bf16 %v1421, %v1421
    %v1423 = vpack.c.bf16 %v141, %v141
    %1425 = vrot.lane.b32.xlu0 %v1423, 32
    %v1426 = vpop.permute.xlu0 %1425
    %vm1427 = vcmask 261120
    %v1430 = vsel %vm1427, %v1422, %v1426
    %v1431 = vld [vmem:[#allocation11] sm:$0xff]
    %v1432 = vld [vmem:[#allocation11 + $0x8] sm:$0xff]
    %v1433 = vld [vmem:[#allocation11 + $0x10] sm:$0xff]
    %v1434 = vld [vmem:[#allocation11 + $0x18] sm:$0xff]
    %v1435 = vld [vmem:[#allocation11 + $0x20] sm:$0xff]
    %v1436 = vld [vmem:[#allocation11 + $0x28] sm:$0xff]
    %v1437 = vld [vmem:[#allocation11 + $0x30] sm:$0xff]
    %v1438 = vld [vmem:[#allocation11 + $0x38] sm:$0xff]
    %v1439 = vld [vmem:[#allocation13] sm:$0x3]
    %v1441 = vlaneseq
    %v1442 = vshrl.u32 %v1441, 7
    %v1443 = vsub.s32 0, %v1442
    %v1444 = vrot.slane %v1439, %v1443
    %v1445 = vlaneseq
    %v1446 = vshrl.u32 %v1445, 7
    %v1447 = vsub.s32 1, %v1446
    %v1448 = vrot.slane %v1439, %v1447
    %v1459 = vunpack.c.l.b16 %v1431
    %v1460 = vunpack.c.h.b16 %v1431
    %v1461 = vunpack.c.l.b16 %v1432
    %v1462 = vunpack.c.h.b16 %v1432
    %v1463 = vunpack.c.l.b16 %v1433
    %v1464 = vunpack.c.h.b16 %v1433
    %v1465 = vunpack.c.l.b16 %v1434
    %v1466 = vunpack.c.h.b16 %v1434
    %v1467 = vunpack.c.l.b16 %v1435
    %v1468 = vunpack.c.h.b16 %v1435
    %v1469 = vunpack.c.l.b16 %v1436
    %v1470 = vunpack.c.h.b16 %v1436
    %v1471 = vunpack.c.l.b16 %v1437
    %v1472 = vunpack.c.h.b16 %v1437
    %v1473 = vunpack.c.l.b16 %v1438
    %v1474 = vunpack.c.h.b16 %v1438
    %v1475 = vpack.c.b16 %v1461, %v1459
    %v1476 = vpack.c.b16 %v1462, %v1460
    %v1477 = vpack.c.b16 %v1465, %v1463
    %v1478 = vpack.c.b16 %v1466, %v1464
    %v1479 = vpack.c.b16 %v1469, %v1467
    %v1480 = vpack.c.b16 %v1470, %v1468
    %v1481 = vpack.c.b16 %v1473, %v1471
    %v1482 = vpack.c.b16 %v1474, %v1472
    %vm1491 = vcmask 523264
    %v1492 = vsel %vm1491, %v1430, 0
    %1494 = vmatprep.subr.bf16.mxu0 %v1476
    %1495 = vmatpush1.bf16.msra.mxu0 %v1475
    %1496 = vmatprep.subr.bf16.mxu0 %v1478
    %1497 = vmatpush1.bf16.msra.mxu0 %v1477
    %1498 = vmatprep.subr.bf16.mxu0 %v1480
    %1499 = vmatpush1.bf16.msra.mxu0 %v1479
    %1500 = vmatprep.subr.bf16.mxu0 %v1482
    %1501 = vmatpush1.bf16.msra.mxu0 %v1481
    %1502 = vmatprep.subr.bf16.mxu0 0
    %1503 = vmatpush1.bf16.msra.mxu0 0
    %1504 = vmatprep.subr.bf16.mxu0 0
    %1505 = vmatpush1.bf16.msra.mxu0 0
    %1506 = vmatprep.subr.bf16.mxu0 0
    %1507 = vmatpush1.bf16.msra.mxu0 0
    %1508 = vmatprep.subr.bf16.mxu0 0
    %1509 = vmatpush1.bf16.msra.mxu0 0
    %1510 = vmatprep.subr.bf16.mxu0 0
    %1511 = vmatpush1.bf16.msra.mxu0 0
    %1512 = vmatprep.subr.bf16.mxu0 0
    %1513 = vmatpush1.bf16.msra.mxu0 0
    %1514 = vmatprep.subr.bf16.mxu0 0
    %1515 = vmatpush1.bf16.msra.mxu0 0
    %1516 = vmatprep.subr.bf16.mxu0 0
    %1517 = vmatpush1.bf16.msra.mxu0 0
    %1518 = vmatprep.subr.bf16.mxu0 0
    %1519 = vmatpush1.bf16.msra.mxu0 0
    %1520 = vmatprep.subr.bf16.mxu0 0
    %1521 = vmatpush1.bf16.msra.mxu0 0
    %1522 = vmatprep.subr.bf16.mxu0 0
    %1523 = vmatpush1.bf16.msra.mxu0 0
    %1524 = vmatprep.subr.bf16.mxu0 0
    %1525 = vmatpush1.bf16.msra.mxu0 0
    %1526 = vmatprep.mubr.bf16.mxu0 0
    %1527 = vmatmul.mubr.bf16.gmra.mrb[0].mxu0 %v1492
    %v1528 = vpop.f32.mrb[0].mxu0
    %v1529 = vadd.f32 %v1444, %v1528
    %v1530 = vpop.f32.mrb[0].mxu0
    %v1531 = vadd.f32 %v1448, %v1530
    %v1532 = vpop.f32.mrb[0].mxu0
    %v1533 = vpop.f32.mrb[0].mxu0
    %1534 = vdwg.mxu0
    %1536 = vrot.lane.b32.xlu0 %v1529, 32
    %v1537 = vpop.permute.xlu0 %1536
    %v1539 = vadd.f32 %v1529, %v1537
    %v1540 = vxor.u32 %v1539, 2147483648
    %v1541 = vmul.f32 %v1540, 1.442695
    %v1542 = vpow.pop %v1541
    %v1543 = vadd.f32 %v1542, 1.0
    %v1544 = vrcp.pop %v1543
    %v1545 = vmul.f32 1.0, %v1544
    %1547 = vrot.lane.b32.xlu0 %v1531, 32
    %v1548 = vpop.permute.xlu0 %1547
    %v1550 = vadd.f32 %v1529, %v1548
    %v1551 = vxor.u32 %v1550, 2147483648
    %v1552 = vmul.f32 %v1551, 1.442695
    %v1553 = vpow.pop %v1552
    %v1554 = vadd.f32 %v1553, 1.0
    %v1555 = vrcp.pop %v1554
    %v1556 = vmul.f32 1.0, %v1555
    %1557 = vrot.lane.b32.xlu0 %v1531, 96
    %v1558 = vpop.permute.xlu0 %1557
    %v1560 = vmul.f32 %v1545, %v1558
    %1562 = vrot.lane.b32.xlu0 %v1560, 64
    %v1563 = vpop.permute.xlu0 %1562
    %v1565 = vadd.f32 %v1529, %v1563
    %v1566 = vtanh.pop %v1565
    %v1567 = vsub.f32 1.0, %v1556
    %1569 = vrot.lane.b32.xlu0 %v1566, 96
    %v1570 = vpop.permute.xlu0 %1569
    %v1572 = vmul.f32 %v1567, %v1570
    %1574 = vrot.lane.b32.xlu0 %v141, 32
    %v1575 = vpop.permute.xlu0 %1574
    %v1577 = vmul.f32 %v1556, %v1575
    %v1578 = vadd.f32 %v1572, %v1577
    %v1579 = vld [vmem:[#allocation14] sm:$0x1]
    %v1581 = vlaneseq
    %v1582 = vshrl.u32 %v1581, 7
    %v1583 = vsub.s32 0, %v1582
    %v1584 = vrot.slane %v1579, %v1583
    %1585 = vrot.lane.b32.xlu0 %v1584, 32
    %v1586 = vpop.permute.xlu0 %1585
    %v1588 = vmul.f32 %v1578, %v1586
    %1590 = vrot.lane.b32.xlu0 %v1588, 96
    %v1591 = vpop.permute.xlu0 %1590
    %vm1593 = vcmask 254976
    %v1594 = vsel %vm1593, %v1591, 0.0
    %1595 = vadd.xlane.f32.xlu0 %v1594
    %v1596 = vpop.xlane.xlu0 %1595
    %v1597 = vld [vmem:[#allocation2] sm:$0x1]
    %v1599 = vlaneseq
    %v1600 = vshrl.u32 %v1599, 7
    %v1601 = vsub.s32 0, %v1600
    %v1602 = vrot.slane %v1597, %v1601
    %v1604 = vadd.f32 %v1596, %v1602
    %1606 = vset.pattern.permute.xlu0 0
    %1607 = vperm.xlu0 %1606, %v1604
    %v1608 = vpop.permute.xlu0 %1607
    %1611 = vrot.lane.b32.xlu0 %v1578, 96
    %v1612 = vpop.permute.xlu0 %1611
    %v1614 = vsel %vm1427, %v1612, %v1608
    %1615 = vst [vmem:[%s12] sm:$0x3] %v1614
    // Predicated region
    $region82: #{forward.1} parent=1 // pred_check
      _
    $region83: #{forward.1} parent=1 // pred_check_branch
      %1617 = sbr.rel (0) target = $region85
    $region84: #{forward.1} parent=1 // pred_region
      _
    $region85: #{forward.1} parent=1 // pred_fallthru
      _
    // Predicated region
    $region86: #{forward.1} parent=1 // pred_check
      _
    $region87: #{forward.1} parent=1 // pred_check_branch
      %1619 = sbr.rel (0) target = $region89
    $region88: #{forward.1} parent=1 // pred_region
      _
    $region89: #{forward.1} parent=1 // pred_fallthru
      _
    %1620 = vsyncpa [#allocation4], 1
    %1621 = vsyncpa [#allocation6], 1
    %1622 = vsyncpa [#allocation9], 1
    %1623 = vsyncpa [#allocation12], 1
    %1624 = vsyncpa [#allocation15], 1

</llo_original>
